<compile_context>
chip_gen: v5e
topology: v5e:2x2
jax: 0.10.0
libtpu: 0.0.40
codegen_flags: <defaults>
</compile_context>

<pallas_src>
import math
from functools import partial

import jax
import jax.numpy as jnp
from jax.experimental import pallas as pl
from jax.experimental.pallas import tpu as pltpu

_LANE = 128
_SUB = 8


def _round_up(x, m):
    return (x + m - 1) // m * m


def _mqa_kernel(xq_ref, xkv_ref, qw_ref, qb_ref, wkv_ref, bkv_ref, ow_ref,
                ob_ref, o_ref, q_scr, m_scr, l_scr, acc_scr, *,
                nums_head, dp, scale, kv_tile, seq_len, mask_needed):
    ki = pl.program_id(2)

    @pl.when(ki == 0)
    def _init():
        # Project (and scale) the Q tile once per (batch, q-tile).
        xq = xq_ref[0].astype(jnp.bfloat16)                            # (TQ, Hin)
        q = jnp.dot(xq, qw_ref[...],
                    preferred_element_type=jnp.float32) + qb_ref[...]  # (TQ, Hq)
        q_scr[...] = (q * scale).astype(jnp.bfloat16)                  # scale folded once
        m_scr[...] = jnp.full(m_scr.shape, -jnp.inf, dtype=jnp.float32)
        l_scr[...] = jnp.zeros(l_scr.shape, dtype=jnp.float32)
        acc_scr[...] = jnp.zeros(acc_scr.shape, dtype=jnp.float32)

    # Fused K|V projection for this kv tile: one MXU matmul.
    xkv = xkv_ref[0].astype(jnp.bfloat16)                              # (TK, Hin)
    kv = jnp.dot(xkv, wkv_ref[...],
                 preferred_element_type=jnp.float32) + bkv_ref[...]    # (TK, 2*Dp)
    k = kv[:, :dp].astype(jnp.bfloat16)                                # (TK, Dp)
    v = kv[:, dp:].astype(jnp.bfloat16)                                # (TK, Dp)

    if mask_needed:
        col = jax.lax.broadcasted_iota(jnp.int32, (1, kv_tile), 1)
        valid = (ki * kv_tile + col) < seq_len                         # (1, TK)

    # Online softmax per query head over the single shared K/V head.
    for h in range(nums_head):
        qh = q_scr[:, h * dp:(h + 1) * dp]                             # (TQ, Dp) bf16
        # q @ k^T without materializing a transpose (contraction on dim 1 of both).
        s = jax.lax.dot_general(qh, k, (((1,), (1,)), ((), ())),
                                preferred_element_type=jnp.float32)    # (TQ, TK)
        if mask_needed:
            s = jnp.where(valid, s, -1e30)
        m_prev = m_scr[h]                                              # (TQ, 1)
        m_new = jnp.maximum(m_prev, jnp.max(s, axis=-1, keepdims=True))
        alpha = jnp.exp(m_prev - m_new)
        p = jnp.exp(s - m_new)                                         # (TQ, TK) f32
        l_scr[h] = alpha * l_scr[h] + jnp.sum(p, axis=-1, keepdims=True)
        acc_scr[h] = alpha * acc_scr[h] + jnp.dot(
            p.astype(jnp.bfloat16), v, preferred_element_type=jnp.float32)
        m_scr[h] = m_new

    @pl.when(ki == pl.num_programs(2) - 1)
    def _finalize():
        tq = o_ref.shape[1]
        ho = o_ref.shape[2]
        out = jnp.zeros((tq, ho), jnp.float32)
        # Per-head accumulation into the output projection (no concat).
        for h in range(nums_head):
            oh = acc_scr[h] * pl.reciprocal(l_scr[h], approx=True)     # (TQ, Dp)
            out = out + jnp.dot(oh.astype(jnp.bfloat16),
                                ow_ref[h * dp:(h + 1) * dp, :],
                                preferred_element_type=jnp.float32)
        out = out + ob_ref[...]
        o_ref[0] = out.astype(o_ref.dtype)


def multi_query_attention(x, params, *, nums_head):
    B, S, H = x.shape
    assert H % nums_head == 0
    D = H // nums_head
    qw, qb, kw, kb, vw, vb, ow, ob = params

    # Lane-dense padded geometry (all zero-padding is mathematically exact; the
    # only semantic effect — padded kv rows picking up the K bias — is handled
    # by the in-kernel mask).
    Dp = _round_up(D, _LANE)           # per-head dim
    Hin = _round_up(H, _LANE)          # x feature dim / projection input rows
    Hq = nums_head * Dp                # padded Q / concat width
    Ho = _round_up(H, _LANE)           # padded output columns (lane-dense stores)
    T = min(128, _round_up(S, _SUB))   # query & kv tile; <=128 fits v5e/v6e/v7x VMEM
    S_pad = _round_up(S, T)

    f32, bf16 = jnp.float32, jnp.bfloat16

    x_p = jnp.pad(x, ((0, 0), (0, S_pad - S), (0, Hin - H)))

    # Q projection: pad input rows H->Hin, per-head output columns D->Dp.
    qw_p = jnp.pad(qw.reshape(H, nums_head, D),
                   ((0, Hin - H), (0, 0), (0, Dp - D))).reshape(Hin, Hq).astype(bf16)
    qb_p = jnp.pad(qb.reshape(1, nums_head, D),
                   ((0, 0), (0, 0), (0, Dp - D))).reshape(1, Hq).astype(f32)

    # Fused K|V projection weight (Hin, 2*Dp) and bias (1, 2*Dp).
    kw_p = jnp.pad(kw, ((0, Hin - H), (0, Dp - D)))
    vw_p = jnp.pad(vw, ((0, Hin - H), (0, Dp - D)))
    wkv_p = jnp.concatenate([kw_p, vw_p], axis=1).astype(bf16)
    bkv_p = jnp.concatenate([jnp.pad(kb, ((0, 0), (0, Dp - D))),
                             jnp.pad(vb, ((0, 0), (0, Dp - D)))],
                            axis=1).astype(f32)

    # Output projection: pad per-head input rows D->Dp, output columns H->Ho.
    ow_p = jnp.pad(ow.reshape(nums_head, D, H),
                   ((0, 0), (0, Dp - D), (0, Ho - H))).reshape(Hq, Ho).astype(bf16)
    ob_p = jnp.pad(ob, ((0, 0), (0, Ho - H))).astype(f32)

    kernel = partial(_mqa_kernel, nums_head=nums_head, dp=Dp,
                     scale=1.0 / math.sqrt(D), kv_tile=T, seq_len=S,
                     mask_needed=(S_pad != S))

    const = lambda shape: pl.BlockSpec(shape, lambda b, qi, ki: (0,) * len(shape))

    nq = S_pad // T
    nk = S_pad // T

    out = pl.pallas_call(
        kernel,
        out_shape=jax.ShapeDtypeStruct((B, S_pad, Ho), x.dtype),
        grid_spec=pltpu.PrefetchScalarGridSpec(
            num_scalar_prefetch=0,
            grid=(B, nq, nk),
            in_specs=[
                pl.BlockSpec((1, T, Hin), lambda b, qi, ki: (b, qi, 0)),  # x -> Q rows
                pl.BlockSpec((1, T, Hin), lambda b, qi, ki: (b, ki, 0)),  # x -> K/V rows
                const((Hin, Hq)),      # q_w
                const((1, Hq)),        # q_b
                const((Hin, 2 * Dp)),  # fused k|v weight
                const((1, 2 * Dp)),    # fused k|v bias
                const((Hq, Ho)),       # o_w
                const((1, Ho)),        # o_b
            ],
            out_specs=pl.BlockSpec((1, T, Ho), lambda b, qi, ki: (b, qi, 0)),
            scratch_shapes=[
                pltpu.VMEM((T, Hq), jnp.bfloat16),            # scaled Q tile
                pltpu.VMEM((nums_head, T, 1), jnp.float32),   # running max
                pltpu.VMEM((nums_head, T, 1), jnp.float32),   # running denom
                pltpu.VMEM((nums_head, T, Dp), jnp.float32),  # running numerator
            ]),
        compiler_params=pltpu.CompilerParams(
            dimension_semantics=("parallel", "parallel", "arbitrary"),
            vmem_limit_bytes=32 * 1024 * 1024),
    )(x_p, x_p, qw_p, qb_p, wkv_p, bkv_p, ow_p, ob_p)

    return out[:, :S, :H]


def _reference(x, params, *, nums_head):
    """Pure-JAX f32 reference matching the PyTorch forward (eval mode)."""
    B, S, H = x.shape
    D = H // nums_head
    qw, qb, kw, kb, vw, vb, ow, ob = params
    Q = x @ qw + qb                       # (B, S, H)
    K = x @ kw + kb                       # (B, S, D)
    V = x @ vw + vb                       # (B, S, D)
    q = Q.reshape(B, S, nums_head, D).transpose(0, 2, 1, 3)   # (B, nh, S, D)
    k = K[:, None]                                            # (B, 1, S, D)
    v = V[:, None]                                            # (B, 1, S, D)
    att = jnp.einsum("bhsd,bktd->bhst", q, k) / math.sqrt(D)  # (B, nh, S, S)
    w = jax.nn.softmax(att, axis=-1)
    out = jnp.einsum("bhst,bktd->bhsd", w, v)                 # (B, nh, S, D)
    out = out.transpose(0, 2, 1, 3).reshape(B, S, H)
    return out @ ow + ob


def init_params(key, hidden_dim, nums_head, dtype=jnp.float32):
    head_dim = hidden_dim // nums_head
    keys = jax.random.split(key, 8)
    s = 1.0 / math.sqrt(hidden_dim)
    qw = jax.random.uniform(keys[0], (hidden_dim, hidden_dim), dtype, -s, s)
    qb = jax.random.uniform(keys[1], (1, hidden_dim), dtype, -s, s)
    kw = jax.random.uniform(keys[2], (hidden_dim, head_dim), dtype, -s, s)
    kb = jax.random.uniform(keys[3], (1, head_dim), dtype, -s, s)
    vw = jax.random.uniform(keys[4], (hidden_dim, head_dim), dtype, -s, s)
    vb = jax.random.uniform(keys[5], (1, head_dim), dtype, -s, s)
    ow = jax.random.uniform(keys[6], (hidden_dim, hidden_dim), dtype, -s, s)
    ob = jax.random.uniform(keys[7], (1, hidden_dim), dtype, -s, s)
    return (qw, qb, kw, kb, vw, vb, ow, ob)


if __name__ == "__main__":
    B, S, H, NH = 2, 8, 32, 4

    key = jax.random.PRNGKey(0)
    kx, kp = jax.random.split(key)
    x = jax.random.normal(kx, (B, S, H), jnp.float32)
    params = init_params(kp, H, NH)

    fn = jax.jit(partial(multi_query_attention, nums_head=NH))
    out = jax.block_until_ready(fn(x, params))

    ref = _reference(x, params, *(), nums_head=NH)
    assert out.shape == (B, S, H)
    # bf16 MXU operands + approx reciprocal => compare against the f32
    # reference with a bf16-appropriate tolerance.
    assert jnp.allclose(out, ref, atol=5e-2, rtol=5e-2), "mismatch vs reference"

    print("KERNEL_OK")
</pallas_src>

<mosaic_0001>
module attributes {stable_mosaic.version = 11 : i64} {
  func.func @_mqa_kernel(%arg0: i32, %arg1: i32, %arg2: i32, %arg3: memref<1x8x128xf32, #tpu.memory_space<vmem>>, %arg4: memref<1x8x128xf32, #tpu.memory_space<vmem>>, %arg5: memref<128x512xbf16, #tpu.memory_space<vmem>>, %arg6: memref<1x512xf32, #tpu.memory_space<vmem>>, %arg7: memref<128x256xbf16, #tpu.memory_space<vmem>>, %arg8: memref<1x256xf32, #tpu.memory_space<vmem>>, %arg9: memref<512x128xbf16, #tpu.memory_space<vmem>>, %arg10: memref<1x128xf32, #tpu.memory_space<vmem>>, %arg11: memref<1x8x128xf32, #tpu.memory_space<vmem>>, %arg12: memref<8x512xbf16, #tpu.memory_space<vmem>>, %arg13: memref<4x8x1xf32, #tpu.memory_space<vmem>>, %arg14: memref<4x8x1xf32, #tpu.memory_space<vmem>>, %arg15: memref<4x8x128xf32, #tpu.memory_space<vmem>>) attributes {dimension_semantics = [#tpu.dimension_semantics<parallel>, #tpu.dimension_semantics<parallel>, #tpu.dimension_semantics<arbitrary>], iteration_bounds = array<i64: 2, 1, 1>, scalar_prefetch = 0 : i64, scratch_operands = 4 : i64, tpu.core_type = #tpu.core_type<tc>, window_params = [{transform_indices = @transform_0, window_bounds = array<i64: 1, 8, 128>}, {transform_indices = @transform_1, window_bounds = array<i64: 1, 8, 128>}, {pipeline_mode = #tpu.pipeline_mode<synchronous>, transform_indices = @transform_2, window_bounds = array<i64: 128, 512>}, {pipeline_mode = #tpu.pipeline_mode<synchronous>, transform_indices = @transform_3, window_bounds = array<i64: 1, 512>}, {pipeline_mode = #tpu.pipeline_mode<synchronous>, transform_indices = @transform_4, window_bounds = array<i64: 128, 256>}, {pipeline_mode = #tpu.pipeline_mode<synchronous>, transform_indices = @transform_5, window_bounds = array<i64: 1, 256>}, {pipeline_mode = #tpu.pipeline_mode<synchronous>, transform_indices = @transform_6, window_bounds = array<i64: 512, 128>}, {pipeline_mode = #tpu.pipeline_mode<synchronous>, transform_indices = @transform_7, window_bounds = array<i64: 1, 128>}, {transform_indices = @transform_8, window_bounds = array<i64: 1, 8, 128>}]} {
    %c0_i32 = arith.constant 0 : i32
    %0 = arith.cmpi eq, %arg2, %c0_i32 : i32
    %1 = arith.extui %0 : i1 to i32
    %c0_i32_0 = arith.constant 0 : i32
    %2 = arith.cmpi ne, %1, %c0_i32_0 : i32
    scf.if %2 {
      %c0_99 = arith.constant 0 : index
      %c0_100 = arith.constant 0 : index
      %c0_101 = arith.constant 0 : index
      %154 = vector.load %arg3[%c0_99, %c0_100, %c0_101] : memref<1x8x128xf32, #tpu.memory_space<vmem>>, vector<1x8x128xf32>
      %155 = vector.shape_cast %154 : vector<1x8x128xf32> to vector<8x128xf32>
      %156 = arith.truncf %155 : vector<8x128xf32> to vector<8x128xbf16>
      %c0_102 = arith.constant 0 : index
      %c0_103 = arith.constant 0 : index
      %157 = vector.load %arg5[%c0_102, %c0_103] : memref<128x512xbf16, #tpu.memory_space<vmem>>, vector<128x512xbf16>
      %cst_104 = arith.constant dense<0.000000e+00> : vector<8x512xf32>
      %158 = tpu.matmul %156, %157, %cst_104 {dimension_numbers = #tpu.dot_dimension_numbers<[1], [0], [0], [1], [0, 0, 1, 1], [], []>} : vector<8x128xbf16>, vector<128x512xbf16>, vector<8x512xf32> -> vector<8x512xf32>
      %c0_105 = arith.constant 0 : index
      %c0_106 = arith.constant 0 : index
      %159 = vector.load %arg6[%c0_105, %c0_106] : memref<1x512xf32, #tpu.memory_space<vmem>>, vector<1x512xf32>
      %160 = vector.broadcast %159 : vector<1x512xf32> to vector<8x512xf32>
      %161 = arith.addf %158, %160 : vector<8x512xf32>
      %cst_107 = arith.constant 0.353553385 : f32
      %162 = vector.broadcast %cst_107 : f32 to vector<8x512xf32>
      %163 = arith.mulf %161, %162 : vector<8x512xf32>
      %164 = arith.truncf %163 : vector<8x512xf32> to vector<8x512xbf16>
      %c0_108 = arith.constant 0 : index
      %c0_109 = arith.constant 0 : index
      %165 = vector.load %arg12[%c0_108, %c0_109] : memref<8x512xbf16, #tpu.memory_space<vmem>>, vector<8x512xbf16>
      tpu.vector_store %arg12[%c0_108, %c0_109], %164 {strides = array<i32>} : memref<8x512xbf16, #tpu.memory_space<vmem>>, vector<8x512xbf16>,
      %cst_110 = arith.constant 0xFF800000 : f32
      %166 = vector.broadcast %cst_110 : f32 to vector<4x8x1xf32>
      %c0_111 = arith.constant 0 : index
      %c0_112 = arith.constant 0 : index
      %c0_113 = arith.constant 0 : index
      %167 = vector.load %arg13[%c0_111, %c0_112, %c0_113] : memref<4x8x1xf32, #tpu.memory_space<vmem>>, vector<4x8x1xf32>
      tpu.vector_store %arg13[%c0_111, %c0_112, %c0_113], %166 {strides = array<i32>} : memref<4x8x1xf32, #tpu.memory_space<vmem>>, vector<4x8x1xf32>,
      %cst_114 = arith.constant 0.000000e+00 : f32
      %168 = vector.broadcast %cst_114 : f32 to vector<4x8x1xf32>
      %c0_115 = arith.constant 0 : index
      %c0_116 = arith.constant 0 : index
      %c0_117 = arith.constant 0 : index
      %169 = vector.load %arg14[%c0_115, %c0_116, %c0_117] : memref<4x8x1xf32, #tpu.memory_space<vmem>>, vector<4x8x1xf32>
      tpu.vector_store %arg14[%c0_115, %c0_116, %c0_117], %168 {strides = array<i32>} : memref<4x8x1xf32, #tpu.memory_space<vmem>>, vector<4x8x1xf32>,
      %cst_118 = arith.constant 0.000000e+00 : f32
      %170 = vector.broadcast %cst_118 : f32 to vector<4x8x128xf32>
      %c0_119 = arith.constant 0 : index
      %c0_120 = arith.constant 0 : index
      %c0_121 = arith.constant 0 : index
      %171 = vector.load %arg15[%c0_119, %c0_120, %c0_121] : memref<4x8x128xf32, #tpu.memory_space<vmem>>, vector<4x8x128xf32>
      tpu.vector_store %arg15[%c0_119, %c0_120, %c0_121], %170 {strides = array<i32>} : memref<4x8x128xf32, #tpu.memory_space<vmem>>, vector<4x8x128xf32>,
    } else {
    }
    %c0 = arith.constant 0 : index
    %c0_1 = arith.constant 0 : index
    %c0_2 = arith.constant 0 : index
    %3 = vector.load %arg4[%c0, %c0_1, %c0_2] : memref<1x8x128xf32, #tpu.memory_space<vmem>>, vector<1x8x128xf32>
    %4 = vector.shape_cast %3 : vector<1x8x128xf32> to vector<8x128xf32>
    %5 = arith.truncf %4 : vector<8x128xf32> to vector<8x128xbf16>
    %c0_3 = arith.constant 0 : index
    %c0_4 = arith.constant 0 : index
    %6 = vector.load %arg7[%c0_3, %c0_4] : memref<128x256xbf16, #tpu.memory_space<vmem>>, vector<128x256xbf16>
    %cst = arith.constant dense<0.000000e+00> : vector<8x256xf32>
    %7 = tpu.matmul %5, %6, %cst {dimension_numbers = #tpu.dot_dimension_numbers<[1], [0], [0], [1], [0, 0, 1, 1], [], []>} : vector<8x128xbf16>, vector<128x256xbf16>, vector<8x256xf32> -> vector<8x256xf32>
    %c0_5 = arith.constant 0 : index
    %c0_6 = arith.constant 0 : index
    %8 = vector.load %arg8[%c0_5, %c0_6] : memref<1x256xf32, #tpu.memory_space<vmem>>, vector<1x256xf32>
    %9 = vector.broadcast %8 : vector<1x256xf32> to vector<8x256xf32>
    %10 = arith.addf %7, %9 : vector<8x256xf32>
    %11 = vector.extract_strided_slice %10 {offsets = [0, 0], sizes = [8, 128], strides = [1, 1]} : vector<8x256xf32> to vector<8x128xf32>
    %12 = arith.truncf %11 : vector<8x128xf32> to vector<8x128xbf16>
    %13 = vector.extract_strided_slice %10 {offsets = [0, 128], sizes = [8, 128], strides = [1, 1]} : vector<8x256xf32> to vector<8x128xf32>
    %14 = arith.truncf %13 : vector<8x128xf32> to vector<8x128xbf16>
    %c0_7 = arith.constant 0 : index
    %c0_8 = arith.constant 0 : index
    %15 = vector.load %arg12[%c0_7, %c0_8] : memref<8x512xbf16, #tpu.memory_space<vmem>>, vector<8x128xbf16>
    %cst_9 = arith.constant dense<0.000000e+00> : vector<8x8xf32>
    %16 = tpu.matmul %15, %12, %cst_9 {dimension_numbers = #tpu.dot_dimension_numbers<[1], [1], [0], [0], [0, 0, 1, 0], [], []>} : vector<8x128xbf16>, vector<8x128xbf16>, vector<8x8xf32> -> vector<8x8xf32>
    %c0_10 = arith.constant 0 : index
    %c0_11 = arith.constant 0 : index
    %c0_12 = arith.constant 0 : index
    %17 = vector.load %arg13[%c0_10, %c0_11, %c0_12] : memref<4x8x1xf32, #tpu.memory_space<vmem>>, vector<1x8x1xf32>
    %18 = vector.shape_cast %17 : vector<1x8x1xf32> to vector<8x1xf32>
    %cst_13 = arith.constant dense<0xFF800000> : vector<8xf32>
    %19 = vector.multi_reduction <maximumf>, %16, %cst_13 [1] : vector<8x8xf32> to vector<8xf32>
    %20 = vector.shape_cast %19 : vector<8xf32> to vector<8x1xf32>
    %21 = arith.maximumf %18, %20 : vector<8x1xf32>
    %22 = arith.subf %18, %21 : vector<8x1xf32>
    %23 = math.exp %22 : vector<8x1xf32>
    %24 = vector.broadcast %21 : vector<8x1xf32> to vector<8x8xf32>
    %25 = arith.subf %16, %24 : vector<8x8xf32>
    %26 = math.exp %25 : vector<8x8xf32>
    %c0_14 = arith.constant 0 : index
    %c0_15 = arith.constant 0 : index
    %c0_16 = arith.constant 0 : index
    %27 = vector.load %arg14[%c0_14, %c0_15, %c0_16] : memref<4x8x1xf32, #tpu.memory_space<vmem>>, vector<1x8x1xf32>
    %28 = vector.shape_cast %27 : vector<1x8x1xf32> to vector<8x1xf32>
    %29 = arith.mulf %23, %28 : vector<8x1xf32>
    %cst_17 = arith.constant dense<0.000000e+00> : vector<8xf32>
    %30 = vector.multi_reduction <add>, %26, %cst_17 [1] : vector<8x8xf32> to vector<8xf32>
    %31 = vector.shape_cast %30 : vector<8xf32> to vector<8x1xf32>
    %32 = arith.addf %29, %31 : vector<8x1xf32>
    %c0_18 = arith.constant 0 : index
    %c0_19 = arith.constant 0 : index
    %c0_20 = arith.constant 0 : index
    %33 = vector.load %arg14[%c0_18, %c0_19, %c0_20] : memref<4x8x1xf32, #tpu.memory_space<vmem>>, vector<1x8x1xf32>
    %34 = vector.shape_cast %33 : vector<1x8x1xf32> to vector<8x1xf32>
    %35 = vector.shape_cast %32 : vector<8x1xf32> to vector<1x8x1xf32>
    tpu.vector_store %arg14[%c0_18, %c0_19, %c0_20], %35 {strides = array<i32>} : memref<4x8x1xf32, #tpu.memory_space<vmem>>, vector<1x8x1xf32>,
    %c0_21 = arith.constant 0 : index
    %c0_22 = arith.constant 0 : index
    %c0_23 = arith.constant 0 : index
    %36 = vector.load %arg15[%c0_21, %c0_22, %c0_23] : memref<4x8x128xf32, #tpu.memory_space<vmem>>, vector<1x8x128xf32>
    %37 = vector.shape_cast %36 : vector<1x8x128xf32> to vector<8x128xf32>
    %38 = vector.broadcast %23 : vector<8x1xf32> to vector<8x128xf32>
    %39 = arith.mulf %38, %37 : vector<8x128xf32>
    %40 = arith.truncf %26 : vector<8x8xf32> to vector<8x8xbf16>
    %cst_24 = arith.constant dense<0.000000e+00> : vector<8x128xf32>
    %41 = tpu.matmul %40, %14, %cst_24 {dimension_numbers = #tpu.dot_dimension_numbers<[1], [0], [0], [1], [0, 0, 1, 1], [], []>} : vector<8x8xbf16>, vector<8x128xbf16>, vector<8x128xf32> -> vector<8x128xf32>
    %42 = arith.addf %39, %41 : vector<8x128xf32>
    %c0_25 = arith.constant 0 : index
    %c0_26 = arith.constant 0 : index
    %c0_27 = arith.constant 0 : index
    %43 = vector.load %arg15[%c0_25, %c0_26, %c0_27] : memref<4x8x128xf32, #tpu.memory_space<vmem>>, vector<1x8x128xf32>
    %44 = vector.shape_cast %43 : vector<1x8x128xf32> to vector<8x128xf32>
    %45 = vector.shape_cast %42 : vector<8x128xf32> to vector<1x8x128xf32>
    tpu.vector_store %arg15[%c0_25, %c0_26, %c0_27], %45 {strides = array<i32>} : memref<4x8x128xf32, #tpu.memory_space<vmem>>, vector<1x8x128xf32>,
    %c0_28 = arith.constant 0 : index
    %c0_29 = arith.constant 0 : index
    %c0_30 = arith.constant 0 : index
    %46 = vector.load %arg13[%c0_28, %c0_29, %c0_30] : memref<4x8x1xf32, #tpu.memory_space<vmem>>, vector<1x8x1xf32>
    %47 = vector.shape_cast %46 : vector<1x8x1xf32> to vector<8x1xf32>
    %48 = vector.shape_cast %21 : vector<8x1xf32> to vector<1x8x1xf32>
    tpu.vector_store %arg13[%c0_28, %c0_29, %c0_30], %48 {strides = array<i32>} : memref<4x8x1xf32, #tpu.memory_space<vmem>>, vector<1x8x1xf32>,
    %c0_31 = arith.constant 0 : index
    %c128 = arith.constant 128 : index
    %49 = vector.load %arg12[%c0_31, %c128] : memref<8x512xbf16, #tpu.memory_space<vmem>>, vector<8x128xbf16>
    %cst_32 = arith.constant dense<0.000000e+00> : vector<8x8xf32>
    %50 = tpu.matmul %49, %12, %cst_32 {dimension_numbers = #tpu.dot_dimension_numbers<[1], [1], [0], [0], [0, 0, 1, 0], [], []>} : vector<8x128xbf16>, vector<8x128xbf16>, vector<8x8xf32> -> vector<8x8xf32>
    %c1 = arith.constant 1 : index
    %c0_33 = arith.constant 0 : index
    %c0_34 = arith.constant 0 : index
    %51 = vector.load %arg13[%c1, %c0_33, %c0_34] : memref<4x8x1xf32, #tpu.memory_space<vmem>>, vector<1x8x1xf32>
    %52 = vector.shape_cast %51 : vector<1x8x1xf32> to vector<8x1xf32>
    %cst_35 = arith.constant dense<0xFF800000> : vector<8xf32>
    %53 = vector.multi_reduction <maximumf>, %50, %cst_35 [1] : vector<8x8xf32> to vector<8xf32>
    %54 = vector.shape_cast %53 : vector<8xf32> to vector<8x1xf32>
    %55 = arith.maximumf %52, %54 : vector<8x1xf32>
    %56 = arith.subf %52, %55 : vector<8x1xf32>
    %57 = math.exp %56 : vector<8x1xf32>
    %58 = vector.broadcast %55 : vector<8x1xf32> to vector<8x8xf32>
    %59 = arith.subf %50, %58 : vector<8x8xf32>
    %60 = math.exp %59 : vector<8x8xf32>
    %c1_36 = arith.constant 1 : index
    %c0_37 = arith.constant 0 : index
    %c0_38 = arith.constant 0 : index
    %61 = vector.load %arg14[%c1_36, %c0_37, %c0_38] : memref<4x8x1xf32, #tpu.memory_space<vmem>>, vector<1x8x1xf32>
    %62 = vector.shape_cast %61 : vector<1x8x1xf32> to vector<8x1xf32>
    %63 = arith.mulf %57, %62 : vector<8x1xf32>
    %cst_39 = arith.constant dense<0.000000e+00> : vector<8xf32>
    %64 = vector.multi_reduction <add>, %60, %cst_39 [1] : vector<8x8xf32> to vector<8xf32>
    %65 = vector.shape_cast %64 : vector<8xf32> to vector<8x1xf32>
    %66 = arith.addf %63, %65 : vector<8x1xf32>
    %c1_40 = arith.constant 1 : index
    %c0_41 = arith.constant 0 : index
    %c0_42 = arith.constant 0 : index
    %67 = vector.load %arg14[%c1_40, %c0_41, %c0_42] : memref<4x8x1xf32, #tpu.memory_space<vmem>>, vector<1x8x1xf32>
    %68 = vector.shape_cast %67 : vector<1x8x1xf32> to vector<8x1xf32>
    %69 = vector.shape_cast %66 : vector<8x1xf32> to vector<1x8x1xf32>
    tpu.vector_store %arg14[%c1_40, %c0_41, %c0_42], %69 {strides = array<i32>} : memref<4x8x1xf32, #tpu.memory_space<vmem>>, vector<1x8x1xf32>,
    %c1_43 = arith.constant 1 : index
    %c0_44 = arith.constant 0 : index
    %c0_45 = arith.constant 0 : index
    %70 = vector.load %arg15[%c1_43, %c0_44, %c0_45] : memref<4x8x128xf32, #tpu.memory_space<vmem>>, vector<1x8x128xf32>
    %71 = vector.shape_cast %70 : vector<1x8x128xf32> to vector<8x128xf32>
    %72 = vector.broadcast %57 : vector<8x1xf32> to vector<8x128xf32>
    %73 = arith.mulf %72, %71 : vector<8x128xf32>
    %74 = arith.truncf %60 : vector<8x8xf32> to vector<8x8xbf16>
    %cst_46 = arith.constant dense<0.000000e+00> : vector<8x128xf32>
    %75 = tpu.matmul %74, %14, %cst_46 {dimension_numbers = #tpu.dot_dimension_numbers<[1], [0], [0], [1], [0, 0, 1, 1], [], []>} : vector<8x8xbf16>, vector<8x128xbf16>, vector<8x128xf32> -> vector<8x128xf32>
    %76 = arith.addf %73, %75 : vector<8x128xf32>
    %c1_47 = arith.constant 1 : index
    %c0_48 = arith.constant 0 : index
    %c0_49 = arith.constant 0 : index
    %77 = vector.load %arg15[%c1_47, %c0_48, %c0_49] : memref<4x8x128xf32, #tpu.memory_space<vmem>>, vector<1x8x128xf32>
    %78 = vector.shape_cast %77 : vector<1x8x128xf32> to vector<8x128xf32>
    %79 = vector.shape_cast %76 : vector<8x128xf32> to vector<1x8x128xf32>
    tpu.vector_store %arg15[%c1_47, %c0_48, %c0_49], %79 {strides = array<i32>} : memref<4x8x128xf32, #tpu.memory_space<vmem>>, vector<1x8x128xf32>,
    %c1_50 = arith.constant 1 : index
    %c0_51 = arith.constant 0 : index
    %c0_52 = arith.constant 0 : index
    %80 = vector.load %arg13[%c1_50, %c0_51, %c0_52] : memref<4x8x1xf32, #tpu.memory_space<vmem>>, vector<1x8x1xf32>
    %81 = vector.shape_cast %80 : vector<1x8x1xf32> to vector<8x1xf32>
    %82 = vector.shape_cast %55 : vector<8x1xf32> to vector<1x8x1xf32>
    tpu.vector_store %arg13[%c1_50, %c0_51, %c0_52], %82 {strides = array<i32>} : memref<4x8x1xf32, #tpu.memory_space<vmem>>, vector<1x8x1xf32>,
    %c0_53 = arith.constant 0 : index
    %c256 = arith.constant 256 : index
    %83 = vector.load %arg12[%c0_53, %c256] : memref<8x512xbf16, #tpu.memory_space<vmem>>, vector<8x128xbf16>
    %cst_54 = arith.constant dense<0.000000e+00> : vector<8x8xf32>
    %84 = tpu.matmul %83, %12, %cst_54 {dimension_numbers = #tpu.dot_dimension_numbers<[1], [1], [0], [0], [0, 0, 1, 0], [], []>} : vector<8x128xbf16>, vector<8x128xbf16>, vector<8x8xf32> -> vector<8x8xf32>
    %c2 = arith.constant 2 : index
    %c0_55 = arith.constant 0 : index
    %c0_56 = arith.constant 0 : index
    %85 = vector.load %arg13[%c2, %c0_55, %c0_56] : memref<4x8x1xf32, #tpu.memory_space<vmem>>, vector<1x8x1xf32>
    %86 = vector.shape_cast %85 : vector<1x8x1xf32> to vector<8x1xf32>
    %cst_57 = arith.constant dense<0xFF800000> : vector<8xf32>
    %87 = vector.multi_reduction <maximumf>, %84, %cst_57 [1] : vector<8x8xf32> to vector<8xf32>
    %88 = vector.shape_cast %87 : vector<8xf32> to vector<8x1xf32>
    %89 = arith.maximumf %86, %88 : vector<8x1xf32>
    %90 = arith.subf %86, %89 : vector<8x1xf32>
    %91 = math.exp %90 : vector<8x1xf32>
    %92 = vector.broadcast %89 : vector<8x1xf32> to vector<8x8xf32>
    %93 = arith.subf %84, %92 : vector<8x8xf32>
    %94 = math.exp %93 : vector<8x8xf32>
    %c2_58 = arith.constant 2 : index
    %c0_59 = arith.constant 0 : index
    %c0_60 = arith.constant 0 : index
    %95 = vector.load %arg14[%c2_58, %c0_59, %c0_60] : memref<4x8x1xf32, #tpu.memory_space<vmem>>, vector<1x8x1xf32>
    %96 = vector.shape_cast %95 : vector<1x8x1xf32> to vector<8x1xf32>
    %97 = arith.mulf %91, %96 : vector<8x1xf32>
    %cst_61 = arith.constant dense<0.000000e+00> : vector<8xf32>
    %98 = vector.multi_reduction <add>, %94, %cst_61 [1] : vector<8x8xf32> to vector<8xf32>
    %99 = vector.shape_cast %98 : vector<8xf32> to vector<8x1xf32>
    %100 = arith.addf %97, %99 : vector<8x1xf32>
    %c2_62 = arith.constant 2 : index
    %c0_63 = arith.constant 0 : index
    %c0_64 = arith.constant 0 : index
    %101 = vector.load %arg14[%c2_62, %c0_63, %c0_64] : memref<4x8x1xf32, #tpu.memory_space<vmem>>, vector<1x8x1xf32>
    %102 = vector.shape_cast %101 : vector<1x8x1xf32> to vector<8x1xf32>
    %103 = vector.shape_cast %100 : vector<8x1xf32> to vector<1x8x1xf32>
    tpu.vector_store %arg14[%c2_62, %c0_63, %c0_64], %103 {strides = array<i32>} : memref<4x8x1xf32, #tpu.memory_space<vmem>>, vector<1x8x1xf32>,
    %c2_65 = arith.constant 2 : index
    %c0_66 = arith.constant 0 : index
    %c0_67 = arith.constant 0 : index
    %104 = vector.load %arg15[%c2_65, %c0_66, %c0_67] : memref<4x8x128xf32, #tpu.memory_space<vmem>>, vector<1x8x128xf32>
    %105 = vector.shape_cast %104 : vector<1x8x128xf32> to vector<8x128xf32>
    %106 = vector.broadcast %91 : vector<8x1xf32> to vector<8x128xf32>
    %107 = arith.mulf %106, %105 : vector<8x128xf32>
    %108 = arith.truncf %94 : vector<8x8xf32> to vector<8x8xbf16>
    %cst_68 = arith.constant dense<0.000000e+00> : vector<8x128xf32>
    %109 = tpu.matmul %108, %14, %cst_68 {dimension_numbers = #tpu.dot_dimension_numbers<[1], [0], [0], [1], [0, 0, 1, 1], [], []>} : vector<8x8xbf16>, vector<8x128xbf16>, vector<8x128xf32> -> vector<8x128xf32>
    %110 = arith.addf %107, %109 : vector<8x128xf32>
    %c2_69 = arith.constant 2 : index
    %c0_70 = arith.constant 0 : index
    %c0_71 = arith.constant 0 : index
    %111 = vector.load %arg15[%c2_69, %c0_70, %c0_71] : memref<4x8x128xf32, #tpu.memory_space<vmem>>, vector<1x8x128xf32>
    %112 = vector.shape_cast %111 : vector<1x8x128xf32> to vector<8x128xf32>
    %113 = vector.shape_cast %110 : vector<8x128xf32> to vector<1x8x128xf32>
    tpu.vector_store %arg15[%c2_69, %c0_70, %c0_71], %113 {strides = array<i32>} : memref<4x8x128xf32, #tpu.memory_space<vmem>>, vector<1x8x128xf32>,
    %c2_72 = arith.constant 2 : index
    %c0_73 = arith.constant 0 : index
    %c0_74 = arith.constant 0 : index
    %114 = vector.load %arg13[%c2_72, %c0_73, %c0_74] : memref<4x8x1xf32, #tpu.memory_space<vmem>>, vector<1x8x1xf32>
    %115 = vector.shape_cast %114 : vector<1x8x1xf32> to vector<8x1xf32>
    %116 = vector.shape_cast %89 : vector<8x1xf32> to vector<1x8x1xf32>
    tpu.vector_store %arg13[%c2_72, %c0_73, %c0_74], %116 {strides = array<i32>} : memref<4x8x1xf32, #tpu.memory_space<vmem>>, vector<1x8x1xf32>,
    %c0_75 = arith.constant 0 : index
    %c384 = arith.constant 384 : index
    %117 = vector.load %arg12[%c0_75, %c384] : memref<8x512xbf16, #tpu.memory_space<vmem>>, vector<8x128xbf16>
    %cst_76 = arith.constant dense<0.000000e+00> : vector<8x8xf32>
    %118 = tpu.matmul %117, %12, %cst_76 {dimension_numbers = #tpu.dot_dimension_numbers<[1], [1], [0], [0], [0, 0, 1, 0], [], []>} : vector<8x128xbf16>, vector<8x128xbf16>, vector<8x8xf32> -> vector<8x8xf32>
    %c3 = arith.constant 3 : index
    %c0_77 = arith.constant 0 : index
    %c0_78 = arith.constant 0 : index
    %119 = vector.load %arg13[%c3, %c0_77, %c0_78] : memref<4x8x1xf32, #tpu.memory_space<vmem>>, vector<1x8x1xf32>
    %120 = vector.shape_cast %119 : vector<1x8x1xf32> to vector<8x1xf32>
    %cst_79 = arith.constant dense<0xFF800000> : vector<8xf32>
    %121 = vector.multi_reduction <maximumf>, %118, %cst_79 [1] : vector<8x8xf32> to vector<8xf32>
    %122 = vector.shape_cast %121 : vector<8xf32> to vector<8x1xf32>
    %123 = arith.maximumf %120, %122 : vector<8x1xf32>
    %124 = arith.subf %120, %123 : vector<8x1xf32>
    %125 = math.exp %124 : vector<8x1xf32>
    %126 = vector.broadcast %123 : vector<8x1xf32> to vector<8x8xf32>
    %127 = arith.subf %118, %126 : vector<8x8xf32>
    %128 = math.exp %127 : vector<8x8xf32>
    %c3_80 = arith.constant 3 : index
    %c0_81 = arith.constant 0 : index
    %c0_82 = arith.constant 0 : index
    %129 = vector.load %arg14[%c3_80, %c0_81, %c0_82] : memref<4x8x1xf32, #tpu.memory_space<vmem>>, vector<1x8x1xf32>
    %130 = vector.shape_cast %129 : vector<1x8x1xf32> to vector<8x1xf32>
    %131 = arith.mulf %125, %130 : vector<8x1xf32>
    %cst_83 = arith.constant dense<0.000000e+00> : vector<8xf32>
    %132 = vector.multi_reduction <add>, %128, %cst_83 [1] : vector<8x8xf32> to vector<8xf32>
    %133 = vector.shape_cast %132 : vector<8xf32> to vector<8x1xf32>
    %134 = arith.addf %131, %133 : vector<8x1xf32>
    %c3_84 = arith.constant 3 : index
    %c0_85 = arith.constant 0 : index
    %c0_86 = arith.constant 0 : index
    %135 = vector.load %arg14[%c3_84, %c0_85, %c0_86] : memref<4x8x1xf32, #tpu.memory_space<vmem>>, vector<1x8x1xf32>
    %136 = vector.shape_cast %135 : vector<1x8x1xf32> to vector<8x1xf32>
    %137 = vector.shape_cast %134 : vector<8x1xf32> to vector<1x8x1xf32>
    tpu.vector_store %arg14[%c3_84, %c0_85, %c0_86], %137 {strides = array<i32>} : memref<4x8x1xf32, #tpu.memory_space<vmem>>, vector<1x8x1xf32>,
    %c3_87 = arith.constant 3 : index
    %c0_88 = arith.constant 0 : index
    %c0_89 = arith.constant 0 : index
    %138 = vector.load %arg15[%c3_87, %c0_88, %c0_89] : memref<4x8x128xf32, #tpu.memory_space<vmem>>, vector<1x8x128xf32>
    %139 = vector.shape_cast %138 : vector<1x8x128xf32> to vector<8x128xf32>
    %140 = vector.broadcast %125 : vector<8x1xf32> to vector<8x128xf32>
    %141 = arith.mulf %140, %139 : vector<8x128xf32>
    %142 = arith.truncf %128 : vector<8x8xf32> to vector<8x8xbf16>
    %cst_90 = arith.constant dense<0.000000e+00> : vector<8x128xf32>
    %143 = tpu.matmul %142, %14, %cst_90 {dimension_numbers = #tpu.dot_dimension_numbers<[1], [0], [0], [1], [0, 0, 1, 1], [], []>} : vector<8x8xbf16>, vector<8x128xbf16>, vector<8x128xf32> -> vector<8x128xf32>
    %144 = arith.addf %141, %143 : vector<8x128xf32>
    %c3_91 = arith.constant 3 : index
    %c0_92 = arith.constant 0 : index
    %c0_93 = arith.constant 0 : index
    %145 = vector.load %arg15[%c3_91, %c0_92, %c0_93] : memref<4x8x128xf32, #tpu.memory_space<vmem>>, vector<1x8x128xf32>
    %146 = vector.shape_cast %145 : vector<1x8x128xf32> to vector<8x128xf32>
    %147 = vector.shape_cast %144 : vector<8x128xf32> to vector<1x8x128xf32>
    tpu.vector_store %arg15[%c3_91, %c0_92, %c0_93], %147 {strides = array<i32>} : memref<4x8x128xf32, #tpu.memory_space<vmem>>, vector<1x8x128xf32>,
    %c3_94 = arith.constant 3 : index
    %c0_95 = arith.constant 0 : index
    %c0_96 = arith.constant 0 : index
    %148 = vector.load %arg13[%c3_94, %c0_95, %c0_96] : memref<4x8x1xf32, #tpu.memory_space<vmem>>, vector<1x8x1xf32>
    %149 = vector.shape_cast %148 : vector<1x8x1xf32> to vector<8x1xf32>
    %150 = vector.shape_cast %123 : vector<8x1xf32> to vector<1x8x1xf32>
    tpu.vector_store %arg13[%c3_94, %c0_95, %c0_96], %150 {strides = array<i32>} : memref<4x8x1xf32, #tpu.memory_space<vmem>>, vector<1x8x1xf32>,
    %c0_i32_97 = arith.constant 0 : i32
    %151 = arith.cmpi eq, %arg2, %c0_i32_97 : i32
    %152 = arith.extui %151 : i1 to i32
    %c0_i32_98 = arith.constant 0 : i32
    %153 = arith.cmpi ne, %152, %c0_i32_98 : i32
    scf.if %153 {
      %cst_99 = arith.constant 0.000000e+00 : f32
      %154 = vector.broadcast %cst_99 : f32 to vector<8x128xf32>
      %c0_100 = arith.constant 0 : index
      %c0_101 = arith.constant 0 : index
      %c0_102 = arith.constant 0 : index
      %155 = vector.load %arg15[%c0_100, %c0_101, %c0_102] : memref<4x8x128xf32, #tpu.memory_space<vmem>>, vector<1x8x128xf32>
      %156 = vector.shape_cast %155 : vector<1x8x128xf32> to vector<8x128xf32>
      %c0_103 = arith.constant 0 : index
      %c0_104 = arith.constant 0 : index
      %c0_105 = arith.constant 0 : index
      %157 = vector.load %arg14[%c0_103, %c0_104, %c0_105] : memref<4x8x1xf32, #tpu.memory_space<vmem>>, vector<1x8x1xf32>
      %158 = vector.shape_cast %157 : vector<1x8x1xf32> to vector<8x1xf32>
      %159 = tpu.reciprocal %158 {approx = true} : vector<8x1xf32> -> vector<8x1xf32>
      %160 = vector.broadcast %159 : vector<8x1xf32> to vector<8x128xf32>
      %161 = arith.mulf %156, %160 : vector<8x128xf32>
      %162 = arith.truncf %161 : vector<8x128xf32> to vector<8x128xbf16>
      %c0_106 = arith.constant 0 : index
      %c0_107 = arith.constant 0 : index
      %163 = vector.load %arg9[%c0_106, %c0_107] : memref<512x128xbf16, #tpu.memory_space<vmem>>, vector<128x128xbf16>
      %cst_108 = arith.constant dense<0.000000e+00> : vector<8x128xf32>
      %164 = tpu.matmul %162, %163, %cst_108 {dimension_numbers = #tpu.dot_dimension_numbers<[1], [0], [0], [1], [0, 0, 1, 1], [], []>} : vector<8x128xbf16>, vector<128x128xbf16>, vector<8x128xf32> -> vector<8x128xf32>
      %165 = arith.addf %154, %164 : vector<8x128xf32>
      %c1_109 = arith.constant 1 : index
      %c0_110 = arith.constant 0 : index
      %c0_111 = arith.constant 0 : index
      %166 = vector.load %arg15[%c1_109, %c0_110, %c0_111] : memref<4x8x128xf32, #tpu.memory_space<vmem>>, vector<1x8x128xf32>
      %167 = vector.shape_cast %166 : vector<1x8x128xf32> to vector<8x128xf32>
      %c1_112 = arith.constant 1 : index
      %c0_113 = arith.constant 0 : index
      %c0_114 = arith.constant 0 : index
      %168 = vector.load %arg14[%c1_112, %c0_113, %c0_114] : memref<4x8x1xf32, #tpu.memory_space<vmem>>, vector<1x8x1xf32>
      %169 = vector.shape_cast %168 : vector<1x8x1xf32> to vector<8x1xf32>
      %170 = tpu.reciprocal %169 {approx = true} : vector<8x1xf32> -> vector<8x1xf32>
      %171 = vector.broadcast %170 : vector<8x1xf32> to vector<8x128xf32>
      %172 = arith.mulf %167, %171 : vector<8x128xf32>
      %173 = arith.truncf %172 : vector<8x128xf32> to vector<8x128xbf16>
      %c128_115 = arith.constant 128 : index
      %c0_116 = arith.constant 0 : index
      %174 = vector.load %arg9[%c128_115, %c0_116] : memref<512x128xbf16, #tpu.memory_space<vmem>>, vector<128x128xbf16>
      %cst_117 = arith.constant dense<0.000000e+00> : vector<8x128xf32>
      %175 = tpu.matmul %173, %174, %cst_117 {dimension_numbers = #tpu.dot_dimension_numbers<[1], [0], [0], [1], [0, 0, 1, 1], [], []>} : vector<8x128xbf16>, vector<128x128xbf16>, vector<8x128xf32> -> vector<8x128xf32>
      %176 = arith.addf %165, %175 : vector<8x128xf32>
      %c2_118 = arith.constant 2 : index
      %c0_119 = arith.constant 0 : index
      %c0_120 = arith.constant 0 : index
      %177 = vector.load %arg15[%c2_118, %c0_119, %c0_120] : memref<4x8x128xf32, #tpu.memory_space<vmem>>, vector<1x8x128xf32>
      %178 = vector.shape_cast %177 : vector<1x8x128xf32> to vector<8x128xf32>
      %c2_121 = arith.constant 2 : index
      %c0_122 = arith.constant 0 : index
      %c0_123 = arith.constant 0 : index
      %179 = vector.load %arg14[%c2_121, %c0_122, %c0_123] : memref<4x8x1xf32, #tpu.memory_space<vmem>>, vector<1x8x1xf32>
      %180 = vector.shape_cast %179 : vector<1x8x1xf32> to vector<8x1xf32>
      %181 = tpu.reciprocal %180 {approx = true} : vector<8x1xf32> -> vector<8x1xf32>
      %182 = vector.broadcast %181 : vector<8x1xf32> to vector<8x128xf32>
      %183 = arith.mulf %178, %182 : vector<8x128xf32>
      %184 = arith.truncf %183 : vector<8x128xf32> to vector<8x128xbf16>
      %c256_124 = arith.constant 256 : index
      %c0_125 = arith.constant 0 : index
      %185 = vector.load %arg9[%c256_124, %c0_125] : memref<512x128xbf16, #tpu.memory_space<vmem>>, vector<128x128xbf16>
      %cst_126 = arith.constant dense<0.000000e+00> : vector<8x128xf32>
      %186 = tpu.matmul %184, %185, %cst_126 {dimension_numbers = #tpu.dot_dimension_numbers<[1], [0], [0], [1], [0, 0, 1, 1], [], []>} : vector<8x128xbf16>, vector<128x128xbf16>, vector<8x128xf32> -> vector<8x128xf32>
      %187 = arith.addf %176, %186 : vector<8x128xf32>
      %c3_127 = arith.constant 3 : index
      %c0_128 = arith.constant 0 : index
      %c0_129 = arith.constant 0 : index
      %188 = vector.load %arg15[%c3_127, %c0_128, %c0_129] : memref<4x8x128xf32, #tpu.memory_space<vmem>>, vector<1x8x128xf32>
      %189 = vector.shape_cast %188 : vector<1x8x128xf32> to vector<8x128xf32>
      %c3_130 = arith.constant 3 : index
      %c0_131 = arith.constant 0 : index
      %c0_132 = arith.constant 0 : index
      %190 = vector.load %arg14[%c3_130, %c0_131, %c0_132] : memref<4x8x1xf32, #tpu.memory_space<vmem>>, vector<1x8x1xf32>
      %191 = vector.shape_cast %190 : vector<1x8x1xf32> to vector<8x1xf32>
      %192 = tpu.reciprocal %191 {approx = true} : vector<8x1xf32> -> vector<8x1xf32>
      %193 = vector.broadcast %192 : vector<8x1xf32> to vector<8x128xf32>
      %194 = arith.mulf %189, %193 : vector<8x128xf32>
      %195 = arith.truncf %194 : vector<8x128xf32> to vector<8x128xbf16>
      %c384_133 = arith.constant 384 : index
      %c0_134 = arith.constant 0 : index
      %196 = vector.load %arg9[%c384_133, %c0_134] : memref<512x128xbf16, #tpu.memory_space<vmem>>, vector<128x128xbf16>
      %cst_135 = arith.constant dense<0.000000e+00> : vector<8x128xf32>
      %197 = tpu.matmul %195, %196, %cst_135 {dimension_numbers = #tpu.dot_dimension_numbers<[1], [0], [0], [1], [0, 0, 1, 1], [], []>} : vector<8x128xbf16>, vector<128x128xbf16>, vector<8x128xf32> -> vector<8x128xf32>
      %198 = arith.addf %187, %197 : vector<8x128xf32>
      %c0_136 = arith.constant 0 : index
      %c0_137 = arith.constant 0 : index
      %199 = vector.load %arg10[%c0_136, %c0_137] : memref<1x128xf32, #tpu.memory_space<vmem>>, vector<1x128xf32>
      %200 = vector.broadcast %199 : vector<1x128xf32> to vector<8x128xf32>
      %201 = arith.addf %198, %200 : vector<8x128xf32>
      %c0_138 = arith.constant 0 : index
      %c0_139 = arith.constant 0 : index
      %c0_140 = arith.constant 0 : index
      %202 = vector.load %arg11[%c0_138, %c0_139, %c0_140] : memref<1x8x128xf32, #tpu.memory_space<vmem>>, vector<1x8x128xf32>
      %203 = vector.shape_cast %202 : vector<1x8x128xf32> to vector<8x128xf32>
      %204 = vector.shape_cast %201 : vector<8x128xf32> to vector<1x8x128xf32>
      tpu.vector_store %arg11[%c0_138, %c0_139, %c0_140], %204 {strides = array<i32>} : memref<1x8x128xf32, #tpu.memory_space<vmem>>, vector<1x8x128xf32>,
    } else {
    }
    return
  }
  func.func @transform_0(%arg0: i32, %arg1: i32, %arg2: i32) -> (i32, i32, i32) {
    %c0_i32 = arith.constant 0 : i32
    %c0_i32_0 = arith.constant 0 : i32
    return %arg0, %arg1, %c0_i32 : i32, i32, i32
  }
  func.func @transform_1(%arg0: i32, %arg1: i32, %arg2: i32) -> (i32, i32, i32) {
    %c0_i32 = arith.constant 0 : i32
    %c0_i32_0 = arith.constant 0 : i32
    return %arg0, %arg2, %c0_i32 : i32, i32, i32
  }
  func.func @transform_2(%arg0: i32, %arg1: i32, %arg2: i32) -> (i32, i32) {
    %c0_i32 = arith.constant 0 : i32
    %c0_i32_0 = arith.constant 0 : i32
    %c0_i32_1 = arith.constant 0 : i32
    return %c0_i32, %c0_i32_0 : i32, i32
  }
  func.func @transform_3(%arg0: i32, %arg1: i32, %arg2: i32) -> (i32, i32) {
    %c0_i32 = arith.constant 0 : i32
    %c0_i32_0 = arith.constant 0 : i32
    %c0_i32_1 = arith.constant 0 : i32
    return %c0_i32, %c0_i32_0 : i32, i32
  }
  func.func @transform_4(%arg0: i32, %arg1: i32, %arg2: i32) -> (i32, i32) {
    %c0_i32 = arith.constant 0 : i32
    %c0_i32_0 = arith.constant 0 : i32
    %c0_i32_1 = arith.constant 0 : i32
    return %c0_i32, %c0_i32_0 : i32, i32
  }
  func.func @transform_5(%arg0: i32, %arg1: i32, %arg2: i32) -> (i32, i32) {
    %c0_i32 = arith.constant 0 : i32
    %c0_i32_0 = arith.constant 0 : i32
    %c0_i32_1 = arith.constant 0 : i32
    return %c0_i32, %c0_i32_0 : i32, i32
  }
  func.func @transform_6(%arg0: i32, %arg1: i32, %arg2: i32) -> (i32, i32) {
    %c0_i32 = arith.constant 0 : i32
    %c0_i32_0 = arith.constant 0 : i32
    %c0_i32_1 = arith.constant 0 : i32
    return %c0_i32, %c0_i32_0 : i32, i32
  }
  func.func @transform_7(%arg0: i32, %arg1: i32, %arg2: i32) -> (i32, i32) {
    %c0_i32 = arith.constant 0 : i32
    %c0_i32_0 = arith.constant 0 : i32
    %c0_i32_1 = arith.constant 0 : i32
    return %c0_i32, %c0_i32_0 : i32, i32
  }
  func.func @transform_8(%arg0: i32, %arg1: i32, %arg2: i32) -> (i32, i32, i32) {
    %c0_i32 = arith.constant 0 : i32
    %c0_i32_0 = arith.constant 0 : i32
    return %arg0, %arg1, %c0_i32 : i32, i32, i32
  }
}

</mosaic_0001>

<llo_original>
// kernel: multi_query_attention.1
$region0: #{multi_query_attention.1}
  #allocation0 [shape = 'u32[]', space=smem, size = 0x4, offset = 0x4, fixed_abs, tag = 'smem constant byte address 0x4 - core index']
  #allocation1 [shape = 'u32[72,128]{1,0:T(1,128)}', space=vmem, size = 0x9000, scoped, tag = 'internal scratch']
  #allocation2 [shape = 'bf16[8,512]{1,0:T(8,128)(2,1)}', space=vmem, size = 0x2000, scoped, tag = 'scratch operand']
  #allocation3 [shape = 'f32[4,8,1]{2,1,0:T(8,128)}', space=vmem, size = 0x4000, scoped, tag = 'scratch operand']
  #allocation4 [shape = 'f32[4,8,1]{2,1,0:T(8,128)}', space=vmem, size = 0x4000, scoped, tag = 'scratch operand']
  #allocation5 [shape = 'f32[4,8,128]{2,1,0:T(8,128)}', space=vmem, size = 0x4000, scoped, tag = 'scratch operand']
  %s0 = inlined_call_operand.vmem [shape: f32[2,8,128], index: 0, kind: input, shape index: {}, may-alias: {0,1}]
  %s1 = inlined_call_operand.vmem [shape: f32[2,8,128], index: 1, kind: input, shape index: {}, may-alias: {0,1}]
  %s2 = inlined_call_operand.vmem [shape: bf16[128,512], index: 2, kind: input, shape index: {}]
  %s3 = inlined_call_operand.vmem [shape: f32[1,512], index: 3, kind: input, shape index: {}]
  %s4 = inlined_call_operand.vmem [shape: bf16[128,256], index: 4, kind: input, shape index: {}]
  %s5 = inlined_call_operand.vmem [shape: f32[1,256], index: 5, kind: input, shape index: {}]
  %s6 = inlined_call_operand.vmem [shape: bf16[512,128], index: 6, kind: input, shape index: {}]
  %s7 = inlined_call_operand.vmem [shape: f32[1,128], index: 7, kind: input, shape index: {}]
  %s8 = inlined_call_operand.hbm [shape: f32[2,8,128], index: 8, kind: output, shape index: {}]
  %s9 = sld [smem:[#allocation0]]
  $region73: #{multi_query_attention.1} parent=0
    _
  %s11 = ssub.s32 1, %s9
  %s12 = scalar_select 0, %s11, %s9
  $region1: #{multi_query_attention.1} parent=0
    #allocation6 [shape = 'u8[8192]{0}', space=vmem, size = 0x2000, scoped, tag = 'output window, operand 0']
    #allocation7 [shape = 's32[2]{0}', space=sflag, size = 0x8, scoped, tag = 'scoped memory for multi_query_attention.1']
    %13 = vsyncpa [#allocation7], 0
    %s14 = scalar_lea.sflag [#allocation7], 1
    %15 = vsyncpa %s14, 0
    loop: start=0, step=1, limit=4
    $region2: #{multi_query_attention.1} parent=1 // loop_pre_header
      _
    $region3: #{multi_query_attention.1} parent=1 // loop_header
      %s17 = sphi 0, %s21
      %p18 = scmp.ge.s32.totalorder %s17, 4
      %s24 = sphi 0, %s43
      %s25 = sphi 0, %s39
      %s26 = sphi 0, %s35
      %s27 = sphi 0, %s24
      %s28 = sphi 0, %s25
      %s29 = sphi 0, %s26
      %s30 = sphi 0, %s27
      %s31 = sphi 0, %s28
      %s32 = sphi 0, %s29
      %s48 = sphi 0, %s50
      %s51 = sphi 0, %s48
      %s52 = sphi 0, %s51
      %s68 = sphi 0, %s52
      %s76 = sphi 0, %s78
      %s79 = sphi 0, %s76
      %s80 = sphi 0, %s79
      %s96 = sphi 0, %s80
      %s100 = sphi 0, %s100
      %s102 = sphi 0, %s100
      %s103 = sphi 0, %s102
      %s117 = sphi 0, %s103
      %s121 = sphi 0, %s121
      %s123 = sphi 0, %s121
      %s124 = sphi 0, %s123
      %s138 = sphi 0, %s124
      %s142 = sphi 0, %s142
      %s144 = sphi 0, %s142
      %s145 = sphi 0, %s144
      %s159 = sphi 0, %s145
      %s163 = sphi 0, %s163
      %s165 = sphi 0, %s163
      %s166 = sphi 0, %s165
      %s180 = sphi 0, %s166
      %s184 = sphi 0, %s184
      %s186 = sphi 0, %s184
      %s187 = sphi 0, %s186
      %s201 = sphi 0, %s187
      %s205 = sphi 0, %s205
      %s207 = sphi 0, %s205
      %s208 = sphi 0, %s207
      %s222 = sphi 0, %s208
      %s230 = sphi 0, %s232
      %s233 = sphi 0, %s230
      %s234 = sphi 0, %s233
      %s250 = sphi 0, %s234
    $region4: #{multi_query_attention.1} parent=1 // loop_header_branch
      %20 = sbr.rel (%p18) target = $region8
    $region5: #{multi_query_attention.1} parent=1 // loop_body
      %s22 = ssub.s32 %s17, 1
      %s23 = ssub.s32 %s17, 2
      %s33 = sadd.s32 1, %s26
      %p34 = scmp.ge.s32.totalorder %s33, 1
      %s35 = scalar_select %p34, 0, %s33
      %s36 = sadd.s32 1, %s25
      %s37 = scalar_select %p34, %s36, %s25
      %p38 = scmp.ge.s32.totalorder %s37, 1
      %s39 = scalar_select %p38, 0, %s37
      %s40 = sadd.s32 1, %s24
      %s41 = scalar_select %p38, %s40, %s24
      %p42 = scmp.ge.s32.totalorder %s41, 2
      %s43 = scalar_select %p42, 0, %s41
      %s44 = ssub.s32 %s24, %s43
      %s45 = ssub.s32 %s25, %s39
      %s46 = sor.u32 %s44, %s45
      %p47 = scmp.eq.s32.totalorder %s46, 0
      %s49 = sadd.s32 %s48, 1
      %s50 = scalar_select %p47, %s48, %s49
      %p53 = pneg %p47
      %p54 = scmp.eq.s32.totalorder %s17, 1
      %p55 = por %p53, %p54
      %p56 = scmp.ne.s32.totalorder %s48, %s51
      %p57 = scmp.eq.s32.totalorder %s17, 0
      %p58 = por %p56, %p57
      %p59 = scmp.ne.s32.totalorder %s48, %s51
      %p60 = scmp.eq.s32.totalorder %s22, 1
      %p61 = por %p59, %p60
      %p62 = scmp.ne.s32.totalorder %s51, %s52
      %p63 = scmp.eq.s32.totalorder %s22, 0
      %p64 = por %p62, %p63
      %p65 = scmp.ne.s32.totalorder %s51, %s52
      %p66 = scmp.eq.s32.totalorder %s23, 1
      %p67 = por %p65, %p66
      %p69 = scmp.ne.s32.totalorder %s52, %s68
      %p70 = scmp.eq.s32.totalorder %s23, 0
      %p71 = por %p69, %p70
      %s72 = ssub.s32 %s24, %s43
      %s73 = ssub.s32 %s26, %s35
      %s74 = sor.u32 %s72, %s73
      %p75 = scmp.eq.s32.totalorder %s74, 0
      %s77 = sadd.s32 %s76, 1
      %s78 = scalar_select %p75, %s76, %s77
      %p81 = pneg %p75
      %p82 = scmp.eq.s32.totalorder %s17, 1
      %p83 = por %p81, %p82
      %p84 = scmp.ne.s32.totalorder %s76, %s79
      %p85 = scmp.eq.s32.totalorder %s17, 0
      %p86 = por %p84, %p85
      %p87 = scmp.ne.s32.totalorder %s76, %s79
      %p88 = scmp.eq.s32.totalorder %s22, 1
      %p89 = por %p87, %p88
      %p90 = scmp.ne.s32.totalorder %s79, %s80
      %p91 = scmp.eq.s32.totalorder %s22, 0
      %p92 = por %p90, %p91
      %p93 = scmp.ne.s32.totalorder %s79, %s80
      %p94 = scmp.eq.s32.totalorder %s23, 1
      %p95 = por %p93, %p94
      %p97 = scmp.ne.s32.totalorder %s80, %s96
      %p98 = scmp.eq.s32.totalorder %s23, 0
      %p99 = por %p97, %p98
      %s101 = sadd.s32 %s100, 1
      %p104 = scmp.eq.s32.totalorder %s17, 1
      %p105 = scmp.ne.s32.totalorder %s100, %s102
      %p106 = scmp.eq.s32.totalorder %s17, 0
      %p107 = por %p105, %p106
      %p108 = scmp.ne.s32.totalorder %s100, %s102
      %p109 = scmp.eq.s32.totalorder %s22, 1
      %p110 = por %p108, %p109
      %p111 = scmp.ne.s32.totalorder %s102, %s103
      %p112 = scmp.eq.s32.totalorder %s22, 0
      %p113 = por %p111, %p112
      %p114 = scmp.ne.s32.totalorder %s102, %s103
      %p115 = scmp.eq.s32.totalorder %s23, 1
      %p116 = por %p114, %p115
      %p118 = scmp.ne.s32.totalorder %s103, %s117
      %p119 = scmp.eq.s32.totalorder %s23, 0
      %p120 = por %p118, %p119
      %s122 = sadd.s32 %s121, 1
      %p125 = scmp.eq.s32.totalorder %s17, 1
      %p126 = scmp.ne.s32.totalorder %s121, %s123
      %p127 = scmp.eq.s32.totalorder %s17, 0
      %p128 = por %p126, %p127
      %p129 = scmp.ne.s32.totalorder %s121, %s123
      %p130 = scmp.eq.s32.totalorder %s22, 1
      %p131 = por %p129, %p130
      %p132 = scmp.ne.s32.totalorder %s123, %s124
      %p133 = scmp.eq.s32.totalorder %s22, 0
      %p134 = por %p132, %p133
      %p135 = scmp.ne.s32.totalorder %s123, %s124
      %p136 = scmp.eq.s32.totalorder %s23, 1
      %p137 = por %p135, %p136
      %p139 = scmp.ne.s32.totalorder %s124, %s138
      %p140 = scmp.eq.s32.totalorder %s23, 0
      %p141 = por %p139, %p140
      %s143 = sadd.s32 %s142, 1
      %p146 = scmp.eq.s32.totalorder %s17, 1
      %p147 = scmp.ne.s32.totalorder %s142, %s144
      %p148 = scmp.eq.s32.totalorder %s17, 0
      %p149 = por %p147, %p148
      %p150 = scmp.ne.s32.totalorder %s142, %s144
      %p151 = scmp.eq.s32.totalorder %s22, 1
      %p152 = por %p150, %p151
      %p153 = scmp.ne.s32.totalorder %s144, %s145
      %p154 = scmp.eq.s32.totalorder %s22, 0
      %p155 = por %p153, %p154
      %p156 = scmp.ne.s32.totalorder %s144, %s145
      %p157 = scmp.eq.s32.totalorder %s23, 1
      %p158 = por %p156, %p157
      %p160 = scmp.ne.s32.totalorder %s145, %s159
      %p161 = scmp.eq.s32.totalorder %s23, 0
      %p162 = por %p160, %p161
      %s164 = sadd.s32 %s163, 1
      %p167 = scmp.eq.s32.totalorder %s17, 1
      %p168 = scmp.ne.s32.totalorder %s163, %s165
      %p169 = scmp.eq.s32.totalorder %s17, 0
      %p170 = por %p168, %p169
      %p171 = scmp.ne.s32.totalorder %s163, %s165
      %p172 = scmp.eq.s32.totalorder %s22, 1
      %p173 = por %p171, %p172
      %p174 = scmp.ne.s32.totalorder %s165, %s166
      %p175 = scmp.eq.s32.totalorder %s22, 0
      %p176 = por %p174, %p175
      %p177 = scmp.ne.s32.totalorder %s165, %s166
      %p178 = scmp.eq.s32.totalorder %s23, 1
      %p179 = por %p177, %p178
      %p181 = scmp.ne.s32.totalorder %s166, %s180
      %p182 = scmp.eq.s32.totalorder %s23, 0
      %p183 = por %p181, %p182
      %s185 = sadd.s32 %s184, 1
      %p188 = scmp.eq.s32.totalorder %s17, 1
      %p189 = scmp.ne.s32.totalorder %s184, %s186
      %p190 = scmp.eq.s32.totalorder %s17, 0
      %p191 = por %p189, %p190
      %p192 = scmp.ne.s32.totalorder %s184, %s186
      %p193 = scmp.eq.s32.totalorder %s22, 1
      %p194 = por %p192, %p193
      %p195 = scmp.ne.s32.totalorder %s186, %s187
      %p196 = scmp.eq.s32.totalorder %s22, 0
      %p197 = por %p195, %p196
      %p198 = scmp.ne.s32.totalorder %s186, %s187
      %p199 = scmp.eq.s32.totalorder %s23, 1
      %p200 = por %p198, %p199
      %p202 = scmp.ne.s32.totalorder %s187, %s201
      %p203 = scmp.eq.s32.totalorder %s23, 0
      %p204 = por %p202, %p203
      %s206 = sadd.s32 %s205, 1
      %p209 = scmp.eq.s32.totalorder %s17, 1
      %p210 = scmp.ne.s32.totalorder %s205, %s207
      %p211 = scmp.eq.s32.totalorder %s17, 0
      %p212 = por %p210, %p211
      %p213 = scmp.ne.s32.totalorder %s205, %s207
      %p214 = scmp.eq.s32.totalorder %s22, 1
      %p215 = por %p213, %p214
      %p216 = scmp.ne.s32.totalorder %s207, %s208
      %p217 = scmp.eq.s32.totalorder %s22, 0
      %p218 = por %p216, %p217
      %p219 = scmp.ne.s32.totalorder %s207, %s208
      %p220 = scmp.eq.s32.totalorder %s23, 1
      %p221 = por %p219, %p220
      %p223 = scmp.ne.s32.totalorder %s208, %s222
      %p224 = scmp.eq.s32.totalorder %s23, 0
      %p225 = por %p223, %p224
      %s226 = ssub.s32 %s24, %s43
      %s227 = ssub.s32 %s25, %s39
      %s228 = sor.u32 %s226, %s227
      %p229 = scmp.eq.s32.totalorder %s228, 0
      %s231 = sadd.s32 %s230, 1
      %s232 = scalar_select %p229, %s230, %s231
      %p235 = pneg %p229
      %p236 = scmp.eq.s32.totalorder %s17, 1
      %p237 = por %p235, %p236
      %p238 = scmp.ne.s32.totalorder %s230, %s233
      %p239 = scmp.eq.s32.totalorder %s17, 0
      %p240 = por %p238, %p239
      %p241 = scmp.ne.s32.totalorder %s230, %s233
      %p242 = scmp.eq.s32.totalorder %s22, 1
      %p243 = por %p241, %p242
      %p244 = scmp.ne.s32.totalorder %s233, %s234
      %p245 = scmp.eq.s32.totalorder %s22, 0
      %p246 = por %p244, %p245
      %p247 = scmp.ne.s32.totalorder %s233, %s234
      %p248 = scmp.eq.s32.totalorder %s23, 1
      %p249 = por %p247, %p248
      %p251 = scmp.ne.s32.totalorder %s234, %s250
      %p252 = scmp.eq.s32.totalorder %s23, 0
      %p253 = por %p251, %p252
      %p254 = scmp.le.s32.totalorder 1, %s17
      %p255 = scmp.lt.s32.totalorder %s17, 3
      %p256 = pnand %p254, %p255
      %p257 = pneg %p256
      // Predicated region
      $region9: #{multi_query_attention.1} parent=5 // pred_check
        _
      $region10: #{multi_query_attention.1} parent=5 // pred_check_branch
        %259 = sbr.rel (%p256) target = $region12
      $region11: #{multi_query_attention.1} parent=5 // pred_region
        %s260 = ssub.s32 %s17, 1
        // Predicated region
        $region13: #{multi_query_attention.1} parent=11 // pred_check
          %p261 = pneg %p113
        $region14: #{multi_query_attention.1} parent=11 // pred_check_branch
          %263 = sbr.rel (%p261) target = $region16
        $region15: #{multi_query_attention.1} parent=11 // pred_region
          _
        $region16: #{multi_query_attention.1} parent=11 // pred_fallthru
          _
        // Predicated region
        $region17: #{multi_query_attention.1} parent=11 // pred_check
          %p264 = pneg %p134
        $region18: #{multi_query_attention.1} parent=11 // pred_check_branch
          %266 = sbr.rel (%p264) target = $region20
        $region19: #{multi_query_attention.1} parent=11 // pred_region
          _
        $region20: #{multi_query_attention.1} parent=11 // pred_fallthru
          _
        // Predicated region
        $region21: #{multi_query_attention.1} parent=11 // pred_check
          %p267 = pneg %p155
        $region22: #{multi_query_attention.1} parent=11 // pred_check_branch
          %269 = sbr.rel (%p267) target = $region24
        $region23: #{multi_query_attention.1} parent=11 // pred_region
          _
        $region24: #{multi_query_attention.1} parent=11 // pred_fallthru
          _
        // Predicated region
        $region25: #{multi_query_attention.1} parent=11 // pred_check
          %p270 = pneg %p176
        $region26: #{multi_query_attention.1} parent=11 // pred_check_branch
          %272 = sbr.rel (%p270) target = $region28
        $region27: #{multi_query_attention.1} parent=11 // pred_region
          _
        $region28: #{multi_query_attention.1} parent=11 // pred_fallthru
          _
        // Predicated region
        $region29: #{multi_query_attention.1} parent=11 // pred_check
          %p273 = pneg %p197
        $region30: #{multi_query_attention.1} parent=11 // pred_check_branch
          %275 = sbr.rel (%p273) target = $region32
        $region31: #{multi_query_attention.1} parent=11 // pred_region
          _
        $region32: #{multi_query_attention.1} parent=11 // pred_fallthru
          _
        // Predicated region
        $region33: #{multi_query_attention.1} parent=11 // pred_check
          %p276 = pneg %p218
        $region34: #{multi_query_attention.1} parent=11 // pred_check_branch
          %278 = sbr.rel (%p276) target = $region36
        $region35: #{multi_query_attention.1} parent=11 // pred_region
          _
        $region36: #{multi_query_attention.1} parent=11 // pred_fallthru
          _
      $region12: #{multi_query_attention.1} parent=5 // pred_fallthru
        _
      %p279 = scmp.lt.s32.totalorder %s17, 2
      // Predicated region
      $region37: #{multi_query_attention.1} parent=5 // pred_check
        %p280 = pneg %p279
      $region38: #{multi_query_attention.1} parent=5 // pred_check_branch
        %282 = sbr.rel (%p280) target = $region40
      $region39: #{multi_query_attention.1} parent=5 // pred_region
        // Predicated region
        $region41: #{multi_query_attention.1} parent=39 // pred_check
          %p283 = pneg %p58
        $region42: #{multi_query_attention.1} parent=39 // pred_check_branch
          %285 = sbr.rel (%p283) target = $region44
        $region43: #{multi_query_attention.1} parent=39 // pred_region
          %p286 = scmp.lt.s32.totalorder %s24, 1
          %s287 = scalar_select %p286, %s24, 1
          %p288 = scmp.lt.s32.totalorder %s25, 0
          %s289 = scalar_select %p288, %s25, 0
          %s290 = sadd.s32 %s289, %s287
          %s291 = smul.addr %s290, 8
          %s292 = scalar_lea.vmem %s0, %s291
        $region44: #{multi_query_attention.1} parent=39 // pred_fallthru
          _
        // Predicated region
        $region45: #{multi_query_attention.1} parent=39 // pred_check
          %p293 = pneg %p86
        $region46: #{multi_query_attention.1} parent=39 // pred_check_branch
          %295 = sbr.rel (%p293) target = $region48
        $region47: #{multi_query_attention.1} parent=39 // pred_region
          %p296 = scmp.lt.s32.totalorder %s24, 1
          %s297 = scalar_select %p296, %s24, 1
          %p298 = scmp.lt.s32.totalorder %s26, 0
          %s299 = scalar_select %p298, %s26, 0
          %s300 = sadd.s32 %s299, %s297
          %s301 = smul.addr %s300, 8
          %s302 = scalar_lea.vmem %s1, %s301
        $region48: #{multi_query_attention.1} parent=39 // pred_fallthru
          _
      $region40: #{multi_query_attention.1} parent=5 // pred_fallthru
        _
      %p303 = scmp.le.s32.totalorder 1, %s17
      %p304 = scmp.lt.s32.totalorder %s17, 3
      %p305 = pnand %p303, %p304
      %p306 = pneg %p305
      // Predicated region
      $region49: #{multi_query_attention.1} parent=5 // pred_check
        _
      $region50: #{multi_query_attention.1} parent=5 // pred_check_branch
        %308 = sbr.rel (%p305) target = $region52
      $region51: #{multi_query_attention.1} parent=5 // pred_region
        %s309 = ssub.s32 %s17, 1
        %p310 = scmp.lt.s32.totalorder %s27, 1
        %s311 = scalar_select %p310, %s27, 1
        %p312 = scmp.lt.s32.totalorder %s28, 0
        %s313 = scalar_select %p312, %s28, 0
        %s314 = sadd.s32 %s313, %s311
        %s315 = smul.addr %s314, 8
        %s316 = scalar_lea.vmem %s0, %s315
        %p317 = pneg %p64
        %p318 = pneg %p61
        %p319 = scmp.lt.s32.totalorder %s27, 1
        %s320 = scalar_select %p319, %s27, 1
        %p321 = scmp.lt.s32.totalorder %s29, 0
        %s322 = scalar_select %p321, %s29, 0
        %s323 = sadd.s32 %s322, %s320
        %s324 = smul.addr %s323, 8
        %s325 = scalar_lea.vmem %s1, %s324
        %p326 = pneg %p92
        %p327 = pneg %p89
        %p328 = pneg %p113
        %p329 = pneg %p110
        %p330 = pneg %p134
        %p331 = pneg %p131
        %p332 = pneg %p155
        %p333 = pneg %p152
        %p334 = pneg %p176
        %p335 = pneg %p173
        %p336 = pneg %p197
        %p337 = pneg %p194
        %p338 = pneg %p218
        %p339 = pneg %p215
        %p340 = pneg %p246
        %p341 = pneg %p243
        %s342 = sand.u32 %s233, 1
        %s343 = scalar_lea.sflag [#allocation7], %s342
        %s344 = sand.u32 %s233, 1
        %s345 = smul.addr %s344, 8
        %s346 = scalar_lea.vmem [#allocation6], %s345
        %p347 = scmp.lt.s32.totalorder %s27, 1
        %s348 = scalar_select %p347, %s27, 1
        %p349 = scmp.lt.s32.totalorder %s28, 0
        %s350 = scalar_select %p349, %s28, 0
        %s351 = sadd.s32 %s350, %s348
        %s352 = smul.addr %s351, 8
        %s353 = scalar_lea.vmem %s0, %s352
        %p354 = scmp.lt.s32.totalorder %s27, 1
        %s355 = scalar_select %p354, %s27, 1
        %p356 = scmp.lt.s32.totalorder %s29, 0
        %s357 = scalar_select %p356, %s29, 0
        %s358 = sadd.s32 %s357, %s355
        %s359 = smul.addr %s358, 8
        %s360 = scalar_lea.vmem %s1, %s359
        %p362 = scmp.eq.s32.totalorder %s29, 0
        // Predicated region
        $region53: #{multi_query_attention.1} parent=51 // pred_check
          %p363 = pneg %p362
        $region54: #{multi_query_attention.1} parent=51 // pred_check_branch
          %365 = sbr.rel (%p363) target = $region56
        $region55: #{multi_query_attention.1} parent=51 // pred_region
          %v366 = vld [vmem:[%s353] sm:$0xff]
          %v367 = vpack.c.bf16 %v366, %v366
          %v368 = vld [vmem:[%s2] sm:$0xff]
          %v369 = vld [vmem:[%s2 + $0x8] sm:$0xff]
          %v370 = vld [vmem:[%s2 + $0x10] sm:$0xff]
          %v371 = vld [vmem:[%s2 + $0x18] sm:$0xff]
          %v372 = vld [vmem:[%s2 + $0x20] sm:$0xff]
          %v373 = vld [vmem:[%s2 + $0x28] sm:$0xff]
          %v374 = vld [vmem:[%s2 + $0x30] sm:$0xff]
          %v375 = vld [vmem:[%s2 + $0x38] sm:$0xff]
          %v376 = vld [vmem:[%s2 + $0x40] sm:$0xff]
          %v377 = vld [vmem:[%s2 + $0x48] sm:$0xff]
          %v378 = vld [vmem:[%s2 + $0x50] sm:$0xff]
          %v379 = vld [vmem:[%s2 + $0x58] sm:$0xff]
          %v380 = vld [vmem:[%s2 + $0x60] sm:$0xff]
          %v381 = vld [vmem:[%s2 + $0x68] sm:$0xff]
          %v382 = vld [vmem:[%s2 + $0x70] sm:$0xff]
          %v383 = vld [vmem:[%s2 + $0x78] sm:$0xff]
          %v384 = vld [vmem:[%s2 + $0x80] sm:$0xff]
          %v385 = vld [vmem:[%s2 + $0x88] sm:$0xff]
          %v386 = vld [vmem:[%s2 + $0x90] sm:$0xff]
          %v387 = vld [vmem:[%s2 + $0x98] sm:$0xff]
          %v388 = vld [vmem:[%s2 + $0xa0] sm:$0xff]
          %v389 = vld [vmem:[%s2 + $0xa8] sm:$0xff]
          %v390 = vld [vmem:[%s2 + $0xb0] sm:$0xff]
          %v391 = vld [vmem:[%s2 + $0xb8] sm:$0xff]
          %v392 = vld [vmem:[%s2 + $0xc0] sm:$0xff]
          %v393 = vld [vmem:[%s2 + $0xc8] sm:$0xff]
          %v394 = vld [vmem:[%s2 + $0xd0] sm:$0xff]
          %v395 = vld [vmem:[%s2 + $0xd8] sm:$0xff]
          %v396 = vld [vmem:[%s2 + $0xe0] sm:$0xff]
          %v397 = vld [vmem:[%s2 + $0xe8] sm:$0xff]
          %v398 = vld [vmem:[%s2 + $0xf0] sm:$0xff]
          %v399 = vld [vmem:[%s2 + $0xf8] sm:$0xff]
          %v400 = vld [vmem:[%s3] sm:$0xf]
          %v402 = vperm.slane %v400, 0
          %v403 = vperm.slane %v400, 1
          %v404 = vperm.slane %v400, 2
          %v405 = vperm.slane %v400, 3
          %v442 = vunpack.c.l.b16 %v368
          %v443 = vunpack.c.h.b16 %v368
          %v444 = vunpack.c.l.b16 %v369
          %v445 = vunpack.c.h.b16 %v369
          %v446 = vunpack.c.l.b16 %v370
          %v447 = vunpack.c.h.b16 %v370
          %v448 = vunpack.c.l.b16 %v371
          %v449 = vunpack.c.h.b16 %v371
          %v450 = vunpack.c.l.b16 %v372
          %v451 = vunpack.c.h.b16 %v372
          %v452 = vunpack.c.l.b16 %v373
          %v453 = vunpack.c.h.b16 %v373
          %v454 = vunpack.c.l.b16 %v374
          %v455 = vunpack.c.h.b16 %v374
          %v456 = vunpack.c.l.b16 %v375
          %v457 = vunpack.c.h.b16 %v375
          %v458 = vunpack.c.l.b16 %v376
          %v459 = vunpack.c.h.b16 %v376
          %v460 = vunpack.c.l.b16 %v377
          %v461 = vunpack.c.h.b16 %v377
          %v462 = vunpack.c.l.b16 %v378
          %v463 = vunpack.c.h.b16 %v378
          %v464 = vunpack.c.l.b16 %v379
          %v465 = vunpack.c.h.b16 %v379
          %v466 = vunpack.c.l.b16 %v380
          %v467 = vunpack.c.h.b16 %v380
          %v468 = vunpack.c.l.b16 %v381
          %v469 = vunpack.c.h.b16 %v381
          %v470 = vunpack.c.l.b16 %v382
          %v471 = vunpack.c.h.b16 %v382
          %v472 = vunpack.c.l.b16 %v383
          %v473 = vunpack.c.h.b16 %v383
          %v474 = vunpack.c.l.b16 %v384
          %v475 = vunpack.c.h.b16 %v384
          %v476 = vunpack.c.l.b16 %v385
          %v477 = vunpack.c.h.b16 %v385
          %v478 = vunpack.c.l.b16 %v386
          %v479 = vunpack.c.h.b16 %v386
          %v480 = vunpack.c.l.b16 %v387
          %v481 = vunpack.c.h.b16 %v387
          %v482 = vunpack.c.l.b16 %v388
          %v483 = vunpack.c.h.b16 %v388
          %v484 = vunpack.c.l.b16 %v389
          %v485 = vunpack.c.h.b16 %v389
          %v486 = vunpack.c.l.b16 %v390
          %v487 = vunpack.c.h.b16 %v390
          %v488 = vunpack.c.l.b16 %v391
          %v489 = vunpack.c.h.b16 %v391
          %v490 = vunpack.c.l.b16 %v392
          %v491 = vunpack.c.h.b16 %v392
          %v492 = vunpack.c.l.b16 %v393
          %v493 = vunpack.c.h.b16 %v393
          %v494 = vunpack.c.l.b16 %v394
          %v495 = vunpack.c.h.b16 %v394
          %v496 = vunpack.c.l.b16 %v395
          %v497 = vunpack.c.h.b16 %v395
          %v498 = vunpack.c.l.b16 %v396
          %v499 = vunpack.c.h.b16 %v396
          %v500 = vunpack.c.l.b16 %v397
          %v501 = vunpack.c.h.b16 %v397
          %v502 = vunpack.c.l.b16 %v398
          %v503 = vunpack.c.h.b16 %v398
          %v504 = vunpack.c.l.b16 %v399
          %v505 = vunpack.c.h.b16 %v399
          %v506 = vpack.c.b16 %v446, %v442
          %v507 = vpack.c.b16 %v447, %v443
          %v508 = vpack.c.b16 %v448, %v444
          %v509 = vpack.c.b16 %v449, %v445
          %v510 = vpack.c.b16 %v454, %v450
          %v511 = vpack.c.b16 %v455, %v451
          %v512 = vpack.c.b16 %v456, %v452
          %v513 = vpack.c.b16 %v457, %v453
          %v514 = vpack.c.b16 %v462, %v458
          %v515 = vpack.c.b16 %v463, %v459
          %v516 = vpack.c.b16 %v464, %v460
          %v517 = vpack.c.b16 %v465, %v461
          %v518 = vpack.c.b16 %v470, %v466
          %v519 = vpack.c.b16 %v471, %v467
          %v520 = vpack.c.b16 %v472, %v468
          %v521 = vpack.c.b16 %v473, %v469
          %v522 = vpack.c.b16 %v478, %v474
          %v523 = vpack.c.b16 %v479, %v475
          %v524 = vpack.c.b16 %v480, %v476
          %v525 = vpack.c.b16 %v481, %v477
          %v526 = vpack.c.b16 %v486, %v482
          %v527 = vpack.c.b16 %v487, %v483
          %v528 = vpack.c.b16 %v488, %v484
          %v529 = vpack.c.b16 %v489, %v485
          %v530 = vpack.c.b16 %v494, %v490
          %v531 = vpack.c.b16 %v495, %v491
          %v532 = vpack.c.b16 %v496, %v492
          %v533 = vpack.c.b16 %v497, %v493
          %v534 = vpack.c.b16 %v502, %v498
          %v535 = vpack.c.b16 %v503, %v499
          %v536 = vpack.c.b16 %v504, %v500
          %v537 = vpack.c.b16 %v505, %v501
          %570 = vmatpush.bf16.msra.mxu0 %v534
          %571 = vmatpush.bf16.msra.mxu0 %v530
          %572 = vmatpush.bf16.msra.mxu0 %v526
          %573 = vmatpush.bf16.msra.mxu0 %v522
          %574 = vmatpush.bf16.msra.mxu0 %v518
          %575 = vmatpush.bf16.msra.mxu0 %v514
          %576 = vmatpush.bf16.msra.mxu0 %v510
          %577 = vmatpush.bf16.msra.mxu0 %v506
          %578 = vmatmul.bf16.gmra.mxu0 %v367
          %v579 = vpop.f32.mrf.mxu0
          %v580 = vadd.f32 %v402, %v579
          %v581 = vpop.f32.mrf.mxu0
          %582 = vdwg.mxu0
          %583 = vmatpush.bf16.msra.mxu0 %v535
          %584 = vmatpush.bf16.msra.mxu0 %v531
          %585 = vmatpush.bf16.msra.mxu0 %v527
          %586 = vmatpush.bf16.msra.mxu0 %v523
          %587 = vmatpush.bf16.msra.mxu0 %v519
          %588 = vmatpush.bf16.msra.mxu0 %v515
          %589 = vmatpush.bf16.msra.mxu0 %v511
          %590 = vmatpush.bf16.msra.mxu0 %v507
          %591 = vmatmul.bf16.gmra.mxu0 %v367
          %v592 = vpop.f32.mrf.mxu0
          %v593 = vadd.f32 %v403, %v592
          %v594 = vpop.f32.mrf.mxu0
          %595 = vdwg.mxu0
          %596 = vmatpush.bf16.msra.mxu0 %v536
          %597 = vmatpush.bf16.msra.mxu0 %v532
          %598 = vmatpush.bf16.msra.mxu0 %v528
          %599 = vmatpush.bf16.msra.mxu0 %v524
          %600 = vmatpush.bf16.msra.mxu0 %v520
          %601 = vmatpush.bf16.msra.mxu0 %v516
          %602 = vmatpush.bf16.msra.mxu0 %v512
          %603 = vmatpush.bf16.msra.mxu0 %v508
          %604 = vmatmul.bf16.gmra.mxu0 %v367
          %v605 = vpop.f32.mrf.mxu0
          %v606 = vadd.f32 %v404, %v605
          %v607 = vpop.f32.mrf.mxu0
          %608 = vdwg.mxu0
          %609 = vmatpush.bf16.msra.mxu0 %v537
          %610 = vmatpush.bf16.msra.mxu0 %v533
          %611 = vmatpush.bf16.msra.mxu0 %v529
          %612 = vmatpush.bf16.msra.mxu0 %v525
          %613 = vmatpush.bf16.msra.mxu0 %v521
          %614 = vmatpush.bf16.msra.mxu0 %v517
          %615 = vmatpush.bf16.msra.mxu0 %v513
          %616 = vmatpush.bf16.msra.mxu0 %v509
          %617 = vmatmul.bf16.gmra.mxu0 %v367
          %v618 = vpop.f32.mrf.mxu0
          %v619 = vadd.f32 %v405, %v618
          %v620 = vpop.f32.mrf.mxu0
          %621 = vdwg.mxu0
          %v622 = vmul.f32 %v580, 0.35355338
          %v623 = vmul.f32 %v593, 0.35355338
          %v624 = vmul.f32 %v606, 0.35355338
          %v625 = vmul.f32 %v619, 0.35355338
          %v626 = vpack.c.bf16 %v623, %v622
          %v627 = vpack.c.bf16 %v625, %v624
          %628 = vst [vmem:[#allocation2] sm:$0xff] %v626
          %629 = vst [vmem:[#allocation2 + $0x8] sm:$0xff] %v627
          %vm630 = vcmask 7168
          %631 = vst.msk [vmem:[#allocation3] sm:$0xff] %vm630, -inf
          %632 = vst.msk [vmem:[#allocation3 + $0x8] sm:$0xff] %vm630, -inf
          %633 = vst.msk [vmem:[#allocation3 + $0x10] sm:$0xff] %vm630, -inf
          %634 = vst.msk [vmem:[#allocation3 + $0x18] sm:$0xff] %vm630, -inf
          %635 = vst.msk [vmem:[#allocation4] sm:$0xff] %vm630, 0.0
          %636 = vst.msk [vmem:[#allocation4 + $0x8] sm:$0xff] %vm630, 0.0
          %637 = vst.msk [vmem:[#allocation4 + $0x10] sm:$0xff] %vm630, 0.0
          %638 = vst.msk [vmem:[#allocation4 + $0x18] sm:$0xff] %vm630, 0.0
          %639 = vst [vmem:[#allocation5] sm:$0xff] 0.0
          %640 = vst [vmem:[#allocation5 + $0x8] sm:$0xff] 0.0
          %641 = vst [vmem:[#allocation5 + $0x10] sm:$0xff] 0.0
          %642 = vst [vmem:[#allocation5 + $0x18] sm:$0xff] 0.0
        $region56: #{multi_query_attention.1} parent=51 // pred_fallthru
          _
        %v643 = vld [vmem:[%s360] sm:$0xff]
        %v644 = vpack.c.bf16 %v643, %v643
        %v645 = vld [vmem:[%s4] sm:$0xff]
        %v646 = vld [vmem:[%s4 + $0x8] sm:$0xff]
        %v647 = vld [vmem:[%s4 + $0x10] sm:$0xff]
        %v648 = vld [vmem:[%s4 + $0x18] sm:$0xff]
        %v649 = vld [vmem:[%s4 + $0x20] sm:$0xff]
        %v650 = vld [vmem:[%s4 + $0x28] sm:$0xff]
        %v651 = vld [vmem:[%s4 + $0x30] sm:$0xff]
        %v652 = vld [vmem:[%s4 + $0x38] sm:$0xff]
        %v653 = vld [vmem:[%s4 + $0x40] sm:$0xff]
        %v654 = vld [vmem:[%s4 + $0x48] sm:$0xff]
        %v655 = vld [vmem:[%s4 + $0x50] sm:$0xff]
        %v656 = vld [vmem:[%s4 + $0x58] sm:$0xff]
        %v657 = vld [vmem:[%s4 + $0x60] sm:$0xff]
        %v658 = vld [vmem:[%s4 + $0x68] sm:$0xff]
        %v659 = vld [vmem:[%s4 + $0x70] sm:$0xff]
        %v660 = vld [vmem:[%s4 + $0x78] sm:$0xff]
        %v661 = vld [vmem:[%s5] sm:$0x3]
        %v663 = vperm.slane %v661, 0
        %v664 = vperm.slane %v661, 1
        %v683 = vunpack.c.l.b16 %v645
        %v684 = vunpack.c.h.b16 %v645
        %v685 = vunpack.c.l.b16 %v646
        %v686 = vunpack.c.h.b16 %v646
        %v687 = vunpack.c.l.b16 %v647
        %v688 = vunpack.c.h.b16 %v647
        %v689 = vunpack.c.l.b16 %v648
        %v690 = vunpack.c.h.b16 %v648
        %v691 = vunpack.c.l.b16 %v649
        %v692 = vunpack.c.h.b16 %v649
        %v693 = vunpack.c.l.b16 %v650
        %v694 = vunpack.c.h.b16 %v650
        %v695 = vunpack.c.l.b16 %v651
        %v696 = vunpack.c.h.b16 %v651
        %v697 = vunpack.c.l.b16 %v652
        %v698 = vunpack.c.h.b16 %v652
        %v699 = vunpack.c.l.b16 %v653
        %v700 = vunpack.c.h.b16 %v653
        %v701 = vunpack.c.l.b16 %v654
        %v702 = vunpack.c.h.b16 %v654
        %v703 = vunpack.c.l.b16 %v655
        %v704 = vunpack.c.h.b16 %v655
        %v705 = vunpack.c.l.b16 %v656
        %v706 = vunpack.c.h.b16 %v656
        %v707 = vunpack.c.l.b16 %v657
        %v708 = vunpack.c.h.b16 %v657
        %v709 = vunpack.c.l.b16 %v658
        %v710 = vunpack.c.h.b16 %v658
        %v711 = vunpack.c.l.b16 %v659
        %v712 = vunpack.c.h.b16 %v659
        %v713 = vunpack.c.l.b16 %v660
        %v714 = vunpack.c.h.b16 %v660
        %v715 = vpack.c.b16 %v685, %v683
        %v716 = vpack.c.b16 %v686, %v684
        %v717 = vpack.c.b16 %v689, %v687
        %v718 = vpack.c.b16 %v690, %v688
        %v719 = vpack.c.b16 %v693, %v691
        %v720 = vpack.c.b16 %v694, %v692
        %v721 = vpack.c.b16 %v697, %v695
        %v722 = vpack.c.b16 %v698, %v696
        %v723 = vpack.c.b16 %v701, %v699
        %v724 = vpack.c.b16 %v702, %v700
        %v725 = vpack.c.b16 %v705, %v703
        %v726 = vpack.c.b16 %v706, %v704
        %v727 = vpack.c.b16 %v709, %v707
        %v728 = vpack.c.b16 %v710, %v708
        %v729 = vpack.c.b16 %v713, %v711
        %v730 = vpack.c.b16 %v714, %v712
        %747 = vmatpush.bf16.msra.mxu0 %v729
        %748 = vmatpush.bf16.msra.mxu0 %v727
        %749 = vmatpush.bf16.msra.mxu0 %v725
        %750 = vmatpush.bf16.msra.mxu0 %v723
        %751 = vmatpush.bf16.msra.mxu0 %v721
        %752 = vmatpush.bf16.msra.mxu0 %v719
        %753 = vmatpush.bf16.msra.mxu0 %v717
        %754 = vmatpush.bf16.msra.mxu0 %v715
        %755 = vmatmul.bf16.gmra.mxu0 %v644
        %v756 = vpop.f32.mrf.mxu0
        %v757 = vadd.f32 %v663, %v756
        %v758 = vpop.f32.mrf.mxu0
        %759 = vdwg.mxu0
        %760 = vmatpush.bf16.msra.mxu0 %v730
        %761 = vmatpush.bf16.msra.mxu0 %v728
        %762 = vmatpush.bf16.msra.mxu0 %v726
        %763 = vmatpush.bf16.msra.mxu0 %v724
        %764 = vmatpush.bf16.msra.mxu0 %v722
        %765 = vmatpush.bf16.msra.mxu0 %v720
        %766 = vmatpush.bf16.msra.mxu0 %v718
        %767 = vmatpush.bf16.msra.mxu0 %v716
        %768 = vmatmul.bf16.gmra.mxu0 %v644
        %v769 = vpop.f32.mrf.mxu0
        %v770 = vadd.f32 %v664, %v769
        %v771 = vpop.f32.mrf.mxu0
        %772 = vdwg.mxu0
        %v773 = vpack.c.bf16 %v757, %v757
        %v774 = vpack.c.bf16 %v770, %v770
        %v775 = vld [vmem:[#allocation2] sm:$0xf]
        %776 = vmatpush.bf16.xpose.msra.mxu0 0
        %777 = vmatpush.bf16.xpose.msra.mxu0 0
        %778 = vmatpush.bf16.xpose.msra.mxu0 0
        %779 = vmatpush.bf16.xpose.msra.mxu0 0
        %780 = vmatpush.bf16.xpose.msra.mxu0 0
        %781 = vmatpush.bf16.xpose.msra.mxu0 0
        %782 = vmatpush.bf16.xpose.msra.mxu0 0
        %783 = vmatpush.bf16.xpose.msra.mxu0 %v773
        %784 = vmatmul.bf16.gmra.mxu0 %v775
        %v785 = vpop.f32.mrf.mxu0
        %v786 = vadd.f32 0.0, %v785
        %v787 = vpop.f32.mrf.mxu0
        %788 = vdwg.mxu0
        %v789 = vld [vmem:[#allocation3] sm:$0xff]
        %vm790 = vcmask 64512
        %v791 = vsel %vm790, %v786, -inf
        %792 = vmax.xlane.f32.xlu0 %v791
        %v793 = vpop.xlane.xlu0 %792
        %v794 = vmax.f32 %v789, %v793
        %v795 = vsub.f32 %v789, %v794
        %v796 = vmul.f32 %v795, 1.442695
        %v797 = vpow.pop %v796
        %799 = vset.pattern.permute.xlu0 0
        %800 = vperm.xlu0 %799, %v794
        %v801 = vpop.permute.xlu0 %800
        %v803 = vsub.f32 %v786, %v801
        %v804 = vmul.f32 %v803, 1.442695
        %v805 = vpow.pop %v804
        %v806 = vld [vmem:[#allocation4] sm:$0xff]
        %v807 = vmul.f32 %v797, %v806
        %v808 = vsel %vm790, %v805, 0.0
        %809 = vadd.xlane.f32.xlu0 %v808
        %v810 = vpop.xlane.xlu0 %809
        %v811 = vadd.f32 %v807, %v810
        %vm812 = vcmask 7168
        %813 = vst.msk [vmem:[#allocation4] sm:$0xff] %vm812, %v811
        %v814 = vld [vmem:[#allocation5] sm:$0xff]
        %816 = vset.pattern.permute.xlu0 0
        %817 = vperm.xlu0 %816, %v797
        %v818 = vpop.permute.xlu0 %817
        %v820 = vmul.f32 %v818, %v814
        %v821 = vpack.c.bf16 %v805, %v805
        %v823 = vsel %vm790, %v821, 0
        %vm825 = vcmask 1043456
        %v827 = vsel %vm825, %v774, 0
        %829 = vmatpush.bf16.msra.mxu0 0
        %830 = vmatpush.bf16.msra.mxu0 0
        %831 = vmatpush.bf16.msra.mxu0 0
        %832 = vmatpush.bf16.msra.mxu0 0
        %833 = vmatpush.bf16.msra.mxu0 0
        %834 = vmatpush.bf16.msra.mxu0 0
        %835 = vmatpush.bf16.msra.mxu0 0
        %836 = vmatpush.bf16.msra.mxu0 %v827
        %837 = vmatmul.bf16.gmra.mxu0 %v823
        %v838 = vpop.f32.mrf.mxu0
        %v839 = vadd.f32 0.0, %v838
        %v840 = vpop.f32.mrf.mxu0
        %841 = vdwg.mxu0
        %v842 = vadd.f32 %v820, %v839
        %843 = vst [vmem:[#allocation5] sm:$0xff] %v842
        %844 = vst.msk [vmem:[#allocation3] sm:$0xff] %vm812, %v794
        %v845 = vld [vmem:[#allocation2 + $0x4] sm:$0xf]
        %846 = vmatpush.bf16.xpose.msra.mxu0 0
        %847 = vmatpush.bf16.xpose.msra.mxu0 0
        %848 = vmatpush.bf16.xpose.msra.mxu0 0
        %849 = vmatpush.bf16.xpose.msra.mxu0 0
        %850 = vmatpush.bf16.xpose.msra.mxu0 0
        %851 = vmatpush.bf16.xpose.msra.mxu0 0
        %852 = vmatpush.bf16.xpose.msra.mxu0 0
        %853 = vmatpush.bf16.xpose.msra.mxu0 %v773
        %854 = vmatmul.bf16.gmra.mxu0 %v845
        %v855 = vpop.f32.mrf.mxu0
        %v856 = vadd.f32 0.0, %v855
        %v857 = vpop.f32.mrf.mxu0
        %858 = vdwg.mxu0
        %s859 = scalar_lea.vmem [#allocation3], 8
        %v860 = vld [vmem:[%s859] sm:$0xff]
        %v861 = vsel %vm790, %v856, -inf
        %862 = vmax.xlane.f32.xlu0 %v861
        %v863 = vpop.xlane.xlu0 %862
        %v864 = vmax.f32 %v860, %v863
        %v865 = vsub.f32 %v860, %v864
        %v866 = vmul.f32 %v865, 1.442695
        %v867 = vpow.pop %v866
        %869 = vset.pattern.permute.xlu0 0
        %870 = vperm.xlu0 %869, %v864
        %v871 = vpop.permute.xlu0 %870
        %v873 = vsub.f32 %v856, %v871
        %v874 = vmul.f32 %v873, 1.442695
        %v875 = vpow.pop %v874
        %s876 = scalar_lea.vmem [#allocation4], 8
        %v877 = vld [vmem:[%s876] sm:$0xff]
        %v878 = vmul.f32 %v867, %v877
        %v879 = vsel %vm790, %v875, 0.0
        %880 = vadd.xlane.f32.xlu0 %v879
        %v881 = vpop.xlane.xlu0 %880
        %v882 = vadd.f32 %v878, %v881
        %883 = vst.msk [vmem:[%s876] sm:$0xff] %vm812, %v882
        %s884 = scalar_lea.vmem [#allocation5], 8
        %v885 = vld [vmem:[%s884] sm:$0xff]
        %887 = vset.pattern.permute.xlu0 0
        %888 = vperm.xlu0 %887, %v867
        %v889 = vpop.permute.xlu0 %888
        %v891 = vmul.f32 %v889, %v885
        %v892 = vpack.c.bf16 %v875, %v875
        %v894 = vsel %vm790, %v892, 0
        %896 = vmatpush.bf16.msra.mxu0 0
        %897 = vmatpush.bf16.msra.mxu0 0
        %898 = vmatpush.bf16.msra.mxu0 0
        %899 = vmatpush.bf16.msra.mxu0 0
        %900 = vmatpush.bf16.msra.mxu0 0
        %901 = vmatpush.bf16.msra.mxu0 0
        %902 = vmatpush.bf16.msra.mxu0 0
        %903 = vmatpush.bf16.msra.mxu0 %v827
        %904 = vmatmul.bf16.gmra.mxu0 %v894
        %v905 = vpop.f32.mrf.mxu0
        %v906 = vadd.f32 0.0, %v905
        %v907 = vpop.f32.mrf.mxu0
        %908 = vdwg.mxu0
        %v909 = vadd.f32 %v891, %v906
        %910 = vst [vmem:[%s884] sm:$0xff] %v909
        %911 = vst.msk [vmem:[%s859] sm:$0xff] %vm812, %v864
        %v912 = vld [vmem:[#allocation2 + $0x8] sm:$0xf]
        %913 = vmatpush.bf16.xpose.msra.mxu0 0
        %914 = vmatpush.bf16.xpose.msra.mxu0 0
        %915 = vmatpush.bf16.xpose.msra.mxu0 0
        %916 = vmatpush.bf16.xpose.msra.mxu0 0
        %917 = vmatpush.bf16.xpose.msra.mxu0 0
        %918 = vmatpush.bf16.xpose.msra.mxu0 0
        %919 = vmatpush.bf16.xpose.msra.mxu0 0
        %920 = vmatpush.bf16.xpose.msra.mxu0 %v773
        %921 = vmatmul.bf16.gmra.mxu0 %v912
        %v922 = vpop.f32.mrf.mxu0
        %v923 = vadd.f32 0.0, %v922
        %v924 = vpop.f32.mrf.mxu0
        %925 = vdwg.mxu0
        %s926 = scalar_lea.vmem [#allocation3], 16
        %v927 = vld [vmem:[%s926] sm:$0xff]
        %v928 = vsel %vm790, %v923, -inf
        %929 = vmax.xlane.f32.xlu0 %v928
        %v930 = vpop.xlane.xlu0 %929
        %v931 = vmax.f32 %v927, %v930
        %v932 = vsub.f32 %v927, %v931
        %v933 = vmul.f32 %v932, 1.442695
        %v934 = vpow.pop %v933
        %936 = vset.pattern.permute.xlu0 0
        %937 = vperm.xlu0 %936, %v931
        %v938 = vpop.permute.xlu0 %937
        %v940 = vsub.f32 %v923, %v938
        %v941 = vmul.f32 %v940, 1.442695
        %v942 = vpow.pop %v941
        %s943 = scalar_lea.vmem [#allocation4], 16
        %v944 = vld [vmem:[%s943] sm:$0xff]
        %v945 = vmul.f32 %v934, %v944
        %v946 = vsel %vm790, %v942, 0.0
        %947 = vadd.xlane.f32.xlu0 %v946
        %v948 = vpop.xlane.xlu0 %947
        %v949 = vadd.f32 %v945, %v948
        %950 = vst.msk [vmem:[%s943] sm:$0xff] %vm812, %v949
        %s951 = scalar_lea.vmem [#allocation5], 16
        %v952 = vld [vmem:[%s951] sm:$0xff]
        %954 = vset.pattern.permute.xlu0 0
        %955 = vperm.xlu0 %954, %v934
        %v956 = vpop.permute.xlu0 %955
        %v958 = vmul.f32 %v956, %v952
        %v959 = vpack.c.bf16 %v942, %v942
        %v961 = vsel %vm790, %v959, 0
        %963 = vmatpush.bf16.msra.mxu0 0
        %964 = vmatpush.bf16.msra.mxu0 0
        %965 = vmatpush.bf16.msra.mxu0 0
        %966 = vmatpush.bf16.msra.mxu0 0
        %967 = vmatpush.bf16.msra.mxu0 0
        %968 = vmatpush.bf16.msra.mxu0 0
        %969 = vmatpush.bf16.msra.mxu0 0
        %970 = vmatpush.bf16.msra.mxu0 %v827
        %971 = vmatmul.bf16.gmra.mxu0 %v961
        %v972 = vpop.f32.mrf.mxu0
        %v973 = vadd.f32 0.0, %v972
        %v974 = vpop.f32.mrf.mxu0
        %975 = vdwg.mxu0
        %v976 = vadd.f32 %v958, %v973
        %977 = vst [vmem:[%s951] sm:$0xff] %v976
        %978 = vst.msk [vmem:[%s926] sm:$0xff] %vm812, %v931
        %v979 = vld [vmem:[#allocation2 + $0xc] sm:$0xf]
        %980 = vmatpush.bf16.xpose.msra.mxu0 0
        %981 = vmatpush.bf16.xpose.msra.mxu0 0
        %982 = vmatpush.bf16.xpose.msra.mxu0 0
        %983 = vmatpush.bf16.xpose.msra.mxu0 0
        %984 = vmatpush.bf16.xpose.msra.mxu0 0
        %985 = vmatpush.bf16.xpose.msra.mxu0 0
        %986 = vmatpush.bf16.xpose.msra.mxu0 0
        %987 = vmatpush.bf16.xpose.msra.mxu0 %v773
        %988 = vmatmul.bf16.gmra.mxu0 %v979
        %v989 = vpop.f32.mrf.mxu0
        %v990 = vadd.f32 0.0, %v989
        %v991 = vpop.f32.mrf.mxu0
        %992 = vdwg.mxu0
        %s993 = scalar_lea.vmem [#allocation3], 24
        %v994 = vld [vmem:[%s993] sm:$0xff]
        %v995 = vsel %vm790, %v990, -inf
        %996 = vmax.xlane.f32.xlu0 %v995
        %v997 = vpop.xlane.xlu0 %996
        %v998 = vmax.f32 %v994, %v997
        %v999 = vsub.f32 %v994, %v998
        %v1000 = vmul.f32 %v999, 1.442695
        %v1001 = vpow.pop %v1000
        %1003 = vset.pattern.permute.xlu0 0
        %1004 = vperm.xlu0 %1003, %v998
        %v1005 = vpop.permute.xlu0 %1004
        %v1007 = vsub.f32 %v990, %v1005
        %v1008 = vmul.f32 %v1007, 1.442695
        %v1009 = vpow.pop %v1008
        %s1010 = scalar_lea.vmem [#allocation4], 24
        %v1011 = vld [vmem:[%s1010] sm:$0xff]
        %v1012 = vmul.f32 %v1001, %v1011
        %v1013 = vsel %vm790, %v1009, 0.0
        %1014 = vadd.xlane.f32.xlu0 %v1013
        %v1015 = vpop.xlane.xlu0 %1014
        %v1016 = vadd.f32 %v1012, %v1015
        %1017 = vst.msk [vmem:[%s1010] sm:$0xff] %vm812, %v1016
        %s1018 = scalar_lea.vmem [#allocation5], 24
        %v1019 = vld [vmem:[%s1018] sm:$0xff]
        %1021 = vset.pattern.permute.xlu0 0
        %1022 = vperm.xlu0 %1021, %v1001
        %v1023 = vpop.permute.xlu0 %1022
        %v1025 = vmul.f32 %v1023, %v1019
        %v1026 = vpack.c.bf16 %v1009, %v1009
        %v1028 = vsel %vm790, %v1026, 0
        %1030 = vmatpush.bf16.msra.mxu0 0
        %1031 = vmatpush.bf16.msra.mxu0 0
        %1032 = vmatpush.bf16.msra.mxu0 0
        %1033 = vmatpush.bf16.msra.mxu0 0
        %1034 = vmatpush.bf16.msra.mxu0 0
        %1035 = vmatpush.bf16.msra.mxu0 0
        %1036 = vmatpush.bf16.msra.mxu0 0
        %1037 = vmatpush.bf16.msra.mxu0 %v827
        %1038 = vmatmul.bf16.gmra.mxu0 %v1028
        %v1039 = vpop.f32.mrf.mxu0
        %v1040 = vadd.f32 0.0, %v1039
        %v1041 = vpop.f32.mrf.mxu0
        %1042 = vdwg.mxu0
        %v1043 = vadd.f32 %v1025, %v1040
        %1044 = vst [vmem:[%s1018] sm:$0xff] %v1043
        %1045 = vst.msk [vmem:[%s993] sm:$0xff] %vm812, %v998
        // Predicated region
        $region57: #{multi_query_attention.1} parent=51 // pred_check
          %p1046 = pneg %p362
        $region58: #{multi_query_attention.1} parent=51 // pred_check_branch
          %1048 = sbr.rel (%p1046) target = $region60
        $region59: #{multi_query_attention.1} parent=51 // pred_region
          %v1049 = vld [vmem:[#allocation5] sm:$0xff]
          %v1050 = vld [vmem:[#allocation4] sm:$0xff]
          %v1051 = vrcp.pop %v1050
          %1053 = vset.pattern.permute.xlu0 0
          %1054 = vperm.xlu0 %1053, %v1051
          %v1055 = vpop.permute.xlu0 %1054
          %v1057 = vmul.f32 %v1049, %v1055
          %v1058 = vpack.c.bf16 %v1057, %v1057
          %v1059 = vld [vmem:[%s6] sm:$0xf]
          %v1060 = vld [vmem:[%s6 + $0x4] sm:$0xf]
          %v1061 = vld [vmem:[%s6 + $0x8] sm:$0xf]
          %v1062 = vld [vmem:[%s6 + $0xc] sm:$0xf]
          %v1063 = vld [vmem:[%s6 + $0x10] sm:$0xf]
          %v1064 = vld [vmem:[%s6 + $0x14] sm:$0xf]
          %v1065 = vld [vmem:[%s6 + $0x18] sm:$0xf]
          %v1066 = vld [vmem:[%s6 + $0x1c] sm:$0xf]
          %v1067 = vld [vmem:[%s6 + $0x20] sm:$0xf]
          %v1068 = vld [vmem:[%s6 + $0x24] sm:$0xf]
          %v1069 = vld [vmem:[%s6 + $0x28] sm:$0xf]
          %v1070 = vld [vmem:[%s6 + $0x2c] sm:$0xf]
          %v1071 = vld [vmem:[%s6 + $0x30] sm:$0xf]
          %v1072 = vld [vmem:[%s6 + $0x34] sm:$0xf]
          %v1073 = vld [vmem:[%s6 + $0x38] sm:$0xf]
          %v1074 = vld [vmem:[%s6 + $0x3c] sm:$0xf]
          %v1075 = vld [vmem:[%s884] sm:$0xff]
          %v1076 = vld [vmem:[%s876] sm:$0xff]
          %v1077 = vrcp.pop %v1076
          %1079 = vset.pattern.permute.xlu0 0
          %1080 = vperm.xlu0 %1079, %v1077
          %v1081 = vpop.permute.xlu0 %1080
          %v1083 = vmul.f32 %v1075, %v1081
          %v1084 = vpack.c.bf16 %v1083, %v1083
          %v1085 = vld [vmem:[%s6 + $0x40] sm:$0xf]
          %v1086 = vld [vmem:[%s6 + $0x44] sm:$0xf]
          %v1087 = vld [vmem:[%s6 + $0x48] sm:$0xf]
          %v1088 = vld [vmem:[%s6 + $0x4c] sm:$0xf]
          %v1089 = vld [vmem:[%s6 + $0x50] sm:$0xf]
          %v1090 = vld [vmem:[%s6 + $0x54] sm:$0xf]
          %v1091 = vld [vmem:[%s6 + $0x58] sm:$0xf]
          %v1092 = vld [vmem:[%s6 + $0x5c] sm:$0xf]
          %v1093 = vld [vmem:[%s6 + $0x60] sm:$0xf]
          %v1094 = vld [vmem:[%s6 + $0x64] sm:$0xf]
          %v1095 = vld [vmem:[%s6 + $0x68] sm:$0xf]
          %v1096 = vld [vmem:[%s6 + $0x6c] sm:$0xf]
          %v1097 = vld [vmem:[%s6 + $0x70] sm:$0xf]
          %v1098 = vld [vmem:[%s6 + $0x74] sm:$0xf]
          %v1099 = vld [vmem:[%s6 + $0x78] sm:$0xf]
          %v1100 = vld [vmem:[%s6 + $0x7c] sm:$0xf]
          %v1117 = vunpack.c.l.b16 %v1085
          %v1118 = vunpack.c.l.b16 %v1086
          %v1119 = vunpack.c.l.b16 %v1087
          %v1120 = vunpack.c.l.b16 %v1088
          %v1121 = vunpack.c.l.b16 %v1089
          %v1122 = vunpack.c.l.b16 %v1090
          %v1123 = vunpack.c.l.b16 %v1091
          %v1124 = vunpack.c.l.b16 %v1092
          %v1125 = vunpack.c.l.b16 %v1093
          %v1126 = vunpack.c.l.b16 %v1094
          %v1127 = vunpack.c.l.b16 %v1095
          %v1128 = vunpack.c.l.b16 %v1096
          %v1129 = vunpack.c.l.b16 %v1097
          %v1130 = vunpack.c.l.b16 %v1098
          %v1131 = vunpack.c.l.b16 %v1099
          %v1132 = vunpack.c.l.b16 %v1100
          %v1133 = vpack.c.b16 %v1118, %v1117
          %v1134 = vpack.c.b16 %v1120, %v1119
          %v1135 = vpack.c.b16 %v1122, %v1121
          %v1136 = vpack.c.b16 %v1124, %v1123
          %v1137 = vpack.c.b16 %v1126, %v1125
          %v1138 = vpack.c.b16 %v1128, %v1127
          %v1139 = vpack.c.b16 %v1130, %v1129
          %v1140 = vpack.c.b16 %v1132, %v1131
          %1149 = vmatpush.bf16.msra.mxu0 %v1140
          %1150 = vmatpush.bf16.msra.mxu0 %v1139
          %1151 = vmatpush.bf16.msra.mxu0 %v1138
          %1152 = vmatpush.bf16.msra.mxu0 %v1137
          %1153 = vmatpush.bf16.msra.mxu0 %v1136
          %1154 = vmatpush.bf16.msra.mxu0 %v1135
          %1155 = vmatpush.bf16.msra.mxu0 %v1134
          %1156 = vmatpush.bf16.msra.mxu0 %v1133
          %1157 = vmatmul.bf16.gmra.mxu0 %v1084
          %v1158 = vpop.f32.mrf.mxu0
          %v1159 = vadd.f32 0.0, %v1158
          %v1160 = vpop.f32.mrf.mxu0
          %1161 = vdwg.mxu0
          %v1178 = vunpack.c.l.b16 %v1059
          %v1179 = vunpack.c.l.b16 %v1060
          %v1180 = vunpack.c.l.b16 %v1061
          %v1181 = vunpack.c.l.b16 %v1062
          %v1182 = vunpack.c.l.b16 %v1063
          %v1183 = vunpack.c.l.b16 %v1064
          %v1184 = vunpack.c.l.b16 %v1065
          %v1185 = vunpack.c.l.b16 %v1066
          %v1186 = vunpack.c.l.b16 %v1067
          %v1187 = vunpack.c.l.b16 %v1068
          %v1188 = vunpack.c.l.b16 %v1069
          %v1189 = vunpack.c.l.b16 %v1070
          %v1190 = vunpack.c.l.b16 %v1071
          %v1191 = vunpack.c.l.b16 %v1072
          %v1192 = vunpack.c.l.b16 %v1073
          %v1193 = vunpack.c.l.b16 %v1074
          %v1194 = vpack.c.b16 %v1179, %v1178
          %v1195 = vpack.c.b16 %v1181, %v1180
          %v1196 = vpack.c.b16 %v1183, %v1182
          %v1197 = vpack.c.b16 %v1185, %v1184
          %v1198 = vpack.c.b16 %v1187, %v1186
          %v1199 = vpack.c.b16 %v1189, %v1188
          %v1200 = vpack.c.b16 %v1191, %v1190
          %v1201 = vpack.c.b16 %v1193, %v1192
          %1210 = vmatpush.bf16.msra.mxu0 %v1201
          %1211 = vmatpush.bf16.msra.mxu0 %v1200
          %1212 = vmatpush.bf16.msra.mxu0 %v1199
          %1213 = vmatpush.bf16.msra.mxu0 %v1198
          %1214 = vmatpush.bf16.msra.mxu0 %v1197
          %1215 = vmatpush.bf16.msra.mxu0 %v1196
          %1216 = vmatpush.bf16.msra.mxu0 %v1195
          %1217 = vmatpush.bf16.msra.mxu0 %v1194
          %1218 = vmatmul.bf16.gmra.mxu0 %v1058
          %v1219 = vpop.f32.mrf.mxu0
          %v1220 = vadd.f32 %v1159, %v1219
          %v1221 = vpop.f32.mrf.mxu0
          %1222 = vdwg.mxu0
          %v1223 = vld [vmem:[%s951] sm:$0xff]
          %v1224 = vld [vmem:[%s943] sm:$0xff]
          %v1225 = vrcp.pop %v1224
          %1227 = vset.pattern.permute.xlu0 0
          %1228 = vperm.xlu0 %1227, %v1225
          %v1229 = vpop.permute.xlu0 %1228
          %v1231 = vmul.f32 %v1223, %v1229
          %v1232 = vpack.c.bf16 %v1231, %v1231
          %v1233 = vld [vmem:[%s6 + $0x80] sm:$0xf]
          %v1234 = vld [vmem:[%s6 + $0x84] sm:$0xf]
          %v1235 = vld [vmem:[%s6 + $0x88] sm:$0xf]
          %v1236 = vld [vmem:[%s6 + $0x8c] sm:$0xf]
          %v1237 = vld [vmem:[%s6 + $0x90] sm:$0xf]
          %v1238 = vld [vmem:[%s6 + $0x94] sm:$0xf]
          %v1239 = vld [vmem:[%s6 + $0x98] sm:$0xf]
          %v1240 = vld [vmem:[%s6 + $0x9c] sm:$0xf]
          %v1241 = vld [vmem:[%s6 + $0xa0] sm:$0xf]
          %v1242 = vld [vmem:[%s6 + $0xa4] sm:$0xf]
          %v1243 = vld [vmem:[%s6 + $0xa8] sm:$0xf]
          %v1244 = vld [vmem:[%s6 + $0xac] sm:$0xf]
          %v1245 = vld [vmem:[%s6 + $0xb0] sm:$0xf]
          %v1246 = vld [vmem:[%s6 + $0xb4] sm:$0xf]
          %v1247 = vld [vmem:[%s6 + $0xb8] sm:$0xf]
          %v1248 = vld [vmem:[%s6 + $0xbc] sm:$0xf]
          %v1265 = vunpack.c.l.b16 %v1233
          %v1266 = vunpack.c.l.b16 %v1234
          %v1267 = vunpack.c.l.b16 %v1235
          %v1268 = vunpack.c.l.b16 %v1236
          %v1269 = vunpack.c.l.b16 %v1237
          %v1270 = vunpack.c.l.b16 %v1238
          %v1271 = vunpack.c.l.b16 %v1239
          %v1272 = vunpack.c.l.b16 %v1240
          %v1273 = vunpack.c.l.b16 %v1241
          %v1274 = vunpack.c.l.b16 %v1242
          %v1275 = vunpack.c.l.b16 %v1243
          %v1276 = vunpack.c.l.b16 %v1244
          %v1277 = vunpack.c.l.b16 %v1245
          %v1278 = vunpack.c.l.b16 %v1246
          %v1279 = vunpack.c.l.b16 %v1247
          %v1280 = vunpack.c.l.b16 %v1248
          %v1281 = vpack.c.b16 %v1266, %v1265
          %v1282 = vpack.c.b16 %v1268, %v1267
          %v1283 = vpack.c.b16 %v1270, %v1269
          %v1284 = vpack.c.b16 %v1272, %v1271
          %v1285 = vpack.c.b16 %v1274, %v1273
          %v1286 = vpack.c.b16 %v1276, %v1275
          %v1287 = vpack.c.b16 %v1278, %v1277
          %v1288 = vpack.c.b16 %v1280, %v1279
          %1297 = vmatpush.bf16.msra.mxu0 %v1288
          %1298 = vmatpush.bf16.msra.mxu0 %v1287
          %1299 = vmatpush.bf16.msra.mxu0 %v1286
          %1300 = vmatpush.bf16.msra.mxu0 %v1285
          %1301 = vmatpush.bf16.msra.mxu0 %v1284
          %1302 = vmatpush.bf16.msra.mxu0 %v1283
          %1303 = vmatpush.bf16.msra.mxu0 %v1282
          %1304 = vmatpush.bf16.msra.mxu0 %v1281
          %1305 = vmatmul.bf16.gmra.mxu0 %v1232
          %v1306 = vpop.f32.mrf.mxu0
          %v1307 = vadd.f32 0.0, %v1306
          %v1308 = vpop.f32.mrf.mxu0
          %1309 = vdwg.mxu0
          %v1310 = vadd.f32 %v1220, %v1307
          %v1311 = vld [vmem:[%s1018] sm:$0xff]
          %v1312 = vld [vmem:[%s1010] sm:$0xff]
          %v1313 = vrcp.pop %v1312
          %1315 = vset.pattern.permute.xlu0 0
          %1316 = vperm.xlu0 %1315, %v1313
          %v1317 = vpop.permute.xlu0 %1316
          %v1319 = vmul.f32 %v1311, %v1317
          %v1320 = vpack.c.bf16 %v1319, %v1319
          %v1321 = vld [vmem:[%s6 + $0xc0] sm:$0xf]
          %v1322 = vld [vmem:[%s6 + $0xc4] sm:$0xf]
          %v1323 = vld [vmem:[%s6 + $0xc8] sm:$0xf]
          %v1324 = vld [vmem:[%s6 + $0xcc] sm:$0xf]
          %v1325 = vld [vmem:[%s6 + $0xd0] sm:$0xf]
          %v1326 = vld [vmem:[%s6 + $0xd4] sm:$0xf]
          %v1327 = vld [vmem:[%s6 + $0xd8] sm:$0xf]
          %v1328 = vld [vmem:[%s6 + $0xdc] sm:$0xf]
          %v1329 = vld [vmem:[%s6 + $0xe0] sm:$0xf]
          %v1330 = vld [vmem:[%s6 + $0xe4] sm:$0xf]
          %v1331 = vld [vmem:[%s6 + $0xe8] sm:$0xf]
          %v1332 = vld [vmem:[%s6 + $0xec] sm:$0xf]
          %v1333 = vld [vmem:[%s6 + $0xf0] sm:$0xf]
          %v1334 = vld [vmem:[%s6 + $0xf4] sm:$0xf]
          %v1335 = vld [vmem:[%s6 + $0xf8] sm:$0xf]
          %v1336 = vld [vmem:[%s6 + $0xfc] sm:$0xf]
          %v1353 = vunpack.c.l.b16 %v1321
          %v1354 = vunpack.c.l.b16 %v1322
          %v1355 = vunpack.c.l.b16 %v1323
          %v1356 = vunpack.c.l.b16 %v1324
          %v1357 = vunpack.c.l.b16 %v1325
          %v1358 = vunpack.c.l.b16 %v1326
          %v1359 = vunpack.c.l.b16 %v1327
          %v1360 = vunpack.c.l.b16 %v1328
          %v1361 = vunpack.c.l.b16 %v1329
          %v1362 = vunpack.c.l.b16 %v1330
          %v1363 = vunpack.c.l.b16 %v1331
          %v1364 = vunpack.c.l.b16 %v1332
          %v1365 = vunpack.c.l.b16 %v1333
          %v1366 = vunpack.c.l.b16 %v1334
          %v1367 = vunpack.c.l.b16 %v1335
          %v1368 = vunpack.c.l.b16 %v1336
          %v1369 = vpack.c.b16 %v1354, %v1353
          %v1370 = vpack.c.b16 %v1356, %v1355
          %v1371 = vpack.c.b16 %v1358, %v1357
          %v1372 = vpack.c.b16 %v1360, %v1359
          %v1373 = vpack.c.b16 %v1362, %v1361
          %v1374 = vpack.c.b16 %v1364, %v1363
          %v1375 = vpack.c.b16 %v1366, %v1365
          %v1376 = vpack.c.b16 %v1368, %v1367
          %1385 = vmatpush.bf16.msra.mxu0 %v1376
          %1386 = vmatpush.bf16.msra.mxu0 %v1375
          %1387 = vmatpush.bf16.msra.mxu0 %v1374
          %1388 = vmatpush.bf16.msra.mxu0 %v1373
          %1389 = vmatpush.bf16.msra.mxu0 %v1372
          %1390 = vmatpush.bf16.msra.mxu0 %v1371
          %1391 = vmatpush.bf16.msra.mxu0 %v1370
          %1392 = vmatpush.bf16.msra.mxu0 %v1369
          %1393 = vmatmul.bf16.gmra.mxu0 %v1320
          %v1394 = vpop.f32.mrf.mxu0
          %v1395 = vadd.f32 0.0, %v1394
          %v1396 = vpop.f32.mrf.mxu0
          %1397 = vdwg.mxu0
          %v1398 = vadd.f32 %v1310, %v1395
          %v1399 = vld [vmem:[%s7] sm:$0x1]
          %v1401 = vperm.slane %v1399, 0
          %v1403 = vadd.f32 %v1398, %v1401
          %1404 = vst [vmem:[%s346] sm:$0xff] %v1403
        $region60: #{multi_query_attention.1} parent=51 // pred_fallthru
          _
        %s1405 = sand.u32 %s233, 1
        %s1406 = scalar_lea.sflag [#allocation7], %s1405
        %s1407 = sand.u32 %s233, 1
        %s1408 = smul.addr %s1407, 8
        %s1409 = scalar_lea.vmem [#allocation6], %s1408
        // Predicated region
        $region61: #{multi_query_attention.1} parent=51 // pred_check
          %p1410 = pneg %p243
        $region62: #{multi_query_attention.1} parent=51 // pred_check_branch
          %1412 = sbr.rel (%p1410) target = $region64
        $region63: #{multi_query_attention.1} parent=51 // pred_region
          %1414 = vsyncadd %s1406, 0
          %s1415 = sadd.s32 %s28, %s27
          %s1416 = smul.addr %s1415, 8
          %s1417 = scalar_lea.hbm %s8, %s1416
          %s1419 = sshll.u32 %s1409, 4
          %s1420 = int_to_ptr.vmem [resolvable:$true] %s1419
          %s1421 = sshll.u32 %s1417, 4
          %s1422 = int_to_ptr.hbm [resolvable:$true] %s1421
          %1424 = dma.vmem_to_hbm [thread:$0]  %s1420, 128, %s1422, %s1406
        $region64: #{multi_query_attention.1} parent=51 // pred_fallthru
          _
      $region52: #{multi_query_attention.1} parent=5 // pred_fallthru
        _
      %p1425 = scmp.le.s32.totalorder 2, %s17
      // Predicated region
      $region65: #{multi_query_attention.1} parent=5 // pred_check
        %p1426 = pneg %p1425
      $region66: #{multi_query_attention.1} parent=5 // pred_check_branch
        %1428 = sbr.rel (%p1426) target = $region68
      $region67: #{multi_query_attention.1} parent=5 // pred_region
        %s1429 = ssub.s32 %s17, 2
        // Predicated region
        $region69: #{multi_query_attention.1} parent=67 // pred_check
          %p1430 = pneg %p249
        $region70: #{multi_query_attention.1} parent=67 // pred_check_branch
          %1432 = sbr.rel (%p1430) target = $region72
        $region71: #{multi_query_attention.1} parent=67 // pred_region
          %s1433 = sand.u32 %s234, 1
          %s1434 = scalar_lea.sflag [#allocation7], %s1433
          %s1435 = sand.u32 %s234, 1
          %s1436 = smul.addr %s1435, 8
          %s1437 = scalar_lea.vmem [#allocation6], %s1436
          %1439 = dma.done %s1434, 128
        $region72: #{multi_query_attention.1} parent=67 // pred_fallthru
          _
      $region68: #{multi_query_attention.1} parent=5 // pred_fallthru
        _
    $region6: #{multi_query_attention.1} parent=1 // loop_footer
      %s21 = sadd.s32 1, %s17
    $region7: #{multi_query_attention.1} parent=1 // loop_footer_branch
      %16 = sbr.rel target = $region3
    $region8: #{multi_query_attention.1} parent=1 // loop_exit
      _
    %1440 = vsyncpa [#allocation7], 1
    %s1441 = scalar_lea.sflag [#allocation7], 1
    %1442 = vsyncpa %s1441, 1

</llo_original>
